<compile_context>
chip_gen: v7x
topology: tpu7x:2x2x1
jax: 0.10.0
libtpu: 0.0.40
codegen_flags: <defaults>
</compile_context>

<pallas_src>
import jax
import jax.numpy as jnp
from jax import lax
from jax.experimental import pallas as pl
from jax.experimental.pallas import tpu as pltpu

_PAD = 8    # zero-border rows: conv zero padding + 8-sublane-aligned interior stores
_WIN = 16   # layer-1 input window size: [x4[v-2] | x4[v-1] | x4[v] | x4[v+1]]
_ZW = 8     # layer-3 tap buffer width (3 taps padded to 8 lanes)


def _encoder_kernel(x4_ref, w1_ref, b1_ref, w2_ref, b2_ref, w3_ref, b3_ref,
                    o_ref, xp_ref, zp_ref):
    f32 = jnp.float32
    tb, useq, _ = x4_ref.shape            # (block_b, L//4, 4)
    kcat = w1_ref.shape[1]                # 5 * nch (= 80)
    nch = w2_ref.shape[1]                 # 16
    mxu_dtype = w1_ref.dtype
    lo, hi = _PAD, _PAD + useq

    # ---- stage the phase-packed input with zero borders (conv padding) ------
    xw = x4_ref[...].astype(f32)
    xp_ref[:, 0:lo, :] = jnp.zeros((tb, _PAD, 4), f32)
    xp_ref[:, hi:hi + _PAD, :] = jnp.zeros((tb, _PAD, 4), f32)
    xp_ref[:, lo:hi, :] = xw

    # ---- layer-1 LHS: 16-sample window per output position ------------------
    lhsx = jnp.concatenate(
        [xp_ref[:, lo - 2:hi - 2, :], xp_ref[:, lo - 1:hi - 1, :],
         xw, xp_ref[:, lo + 1:hi + 1, :]], axis=-1)          # (tb, useq, 16)
    lhsx = lhsx.reshape(tb * useq, _WIN).astype(mxu_dtype)

    # ---- layer 1 (MXU): emit the five layer-1 phases needed by layer 2,
    #      already laid out as layer 2's K=80 LHS:
    #      h1cat[v] = relu([he(v-1) | ho(v-1) | he(v) | ho(v) | he(v+1)])
    h1 = jnp.dot(lhsx, w1_ref[...], preferred_element_type=f32)
    h1 = jnp.maximum(h1 + b1_ref[...], 0.0)                  # (tb*useq, 80) f32

    # Layer-2 zero padding: he/ho entries outside [0, L/2) must be exactly 0
    # (the fused recomputation above turned them into relu(bias + ...)).
    h1 = h1.reshape(tb, useq, kcat)
    v_idx = lax.broadcasted_iota(jnp.int32, (tb, useq, kcat), 1)
    c_idx = lax.broadcasted_iota(jnp.int32, (tb, useq, kcat), 2)
    oob = ((v_idx == 0) & (c_idx < 2 * nch)) | \
          ((v_idx == useq - 1) & (c_idx >= 4 * nch))
    h1 = jnp.where(oob, 0.0, h1).reshape(tb * useq, kcat)

    # ---- layer 2 (MXU): one K=80 matmul + bias + ReLU ------------------------
    a2 = jnp.dot(h1.astype(mxu_dtype), w2_ref[...], preferred_element_type=f32)
    a2 = jnp.maximum(a2 + b2_ref[...], 0.0)                  # (tb*useq, 16)

    # ---- layer 3 channel contraction (MXU): z[v, j] = sum_c a2[v, c]*w3[c, j]
    z = jnp.dot(a2.astype(mxu_dtype), w3_ref[...], preferred_element_type=f32)
    z3 = z.reshape(tb, useq, _ZW)

    # ---- layer 3 spatial taps: +-1 shift-add on the narrow z buffer ----------
    zp_ref[:, 0:lo, :] = jnp.zeros((tb, _PAD, _ZW), f32)
    zp_ref[:, hi:hi + _PAD, :] = jnp.zeros((tb, _PAD, _ZW), f32)
    zp_ref[:, lo:hi, :] = z3

    lane = lax.broadcasted_iota(jnp.int32, (tb, useq, _ZW), 2)
    picked = (jnp.where(lane == 0, zp_ref[:, lo - 1:hi - 1, :], 0.0)   # z[v-1, 0]
              + jnp.where(lane == 1, z3, 0.0)                          # z[v,   1]
              + jnp.where(lane == 2, zp_ref[:, lo + 1:hi + 1, :], 0.0))  # z[v+1, 2]
    y = jnp.sum(picked, axis=-1) + b3_ref[...]               # (tb, useq)
    o_ref[...] = y.astype(o_ref.dtype)                       # == Flatten()


def _round_up(n, m):
    return ((n + m - 1) // m) * m


def _prep_weights(params, mxu_dtype):
    """Fuse the three PyTorch Conv1d weights into the kernel's matmul weights."""
    w1, b1, w2, b2, w3, b3 = params       # torch Conv1d layouts (O, I, K)
    nch = w1.shape[0]
    f32 = jnp.float32

    # Layer 1: (16, 5*nch).  Output column block n emits layer-1 sample
    # h1[2v + n - 2]; LHS column m holds input sample x[4(v-2) + m], and tap j
    # of that output reads input 4v + 2n + j - 6, i.e. column m = 2n + j + 2.
    w1cat = jnp.zeros((_WIN, 5 * nch), f32)
    for n in range(5):
        for j in range(5):
            w1cat = w1cat.at[2 * n + j + 2, n * nch:(n + 1) * nch].set(w1[:, 0, j])
    b1cat = jnp.tile(b1.reshape(1, nch), (1, 5)).astype(f32)           # (1, 5*nch)

    # Layer 2: (5*nch, nch); row nch*j + ci multiplies h1[2v + j - 2, ci].
    w2cat = jnp.transpose(w2, (2, 1, 0)).reshape(5 * nch, nch).astype(f32)

    # Layer 3 channel contraction: (nch, 3) padded to 8 lanes.
    w3cat = jnp.zeros((nch, _ZW), f32).at[:, 0:3].set(w3[0].astype(f32))

    return (w1cat.astype(mxu_dtype), b1cat, w2cat.astype(mxu_dtype),
            b2.reshape(1, nch).astype(f32), w3cat.astype(mxu_dtype),
            b3.reshape(1, 1).astype(f32))


def my_encoder(x, params, *, block_b=128, mxu_dtype=jnp.bfloat16,
               vmem_budget_bytes=28 * 1024 * 1024):
    """Forward pass of MyEncoder(nlayers=3) for x of shape [B, L] (or [B, 1, L])."""
    w1, b1, w2, b2, w3, b3 = params
    if x.ndim == 3:                       # [B, 1, L] -> [B, L]
        x = x[:, 0, :]
    B, L = x.shape
    if L % 4 != 0 or L < 16:
        raise ValueError("sequence length must be a multiple of 4 and >= 16")
    useq = L // 4                         # final length after two stride-2 convs
    nch = w1.shape[0]
    assert w1.shape == (nch, 1, 5) and w2.shape == (nch, nch, 5)
    assert w3.shape == (1, nch, 3)
    # TODO(synk): specialised to the default nlayers=3 topology; no sequence-axis
    # tiling (halo handling) yet, so very long L relies on shrinking the batch tile.

    f32 = jnp.float32
    kcat = 5 * nch
    w1cat, b1cat, w2cat, b2k, w3cat, b3k = _prep_weights(params, mxu_dtype)

    # ---- batch-tile selection: VMEM budget + >=2 grid steps when possible ----
    mxu_bytes = jnp.dtype(mxu_dtype).itemsize
    per_pos = (2 * 4 * x.dtype.itemsize + 2 * 4              # dbl-buffered in/out blocks
               + (4 + _ZW) * 4                               # xp / zp scratch
               + (_WIN + kcat + nch + _ZW) * (4 + mxu_bytes))  # compiler temporaries
    per_row = useq * per_pos
    tb = max(8, min(_round_up(block_b, 8),
                    (vmem_budget_bytes // max(per_row, 1)) // 8 * 8))
    bp8 = _round_up(B, 8)
    tb = min(tb, bp8)
    if bp8 >= 16:                         # keep >=2 parallel steps (v7x: 2 TensorCores)
        tb = min(tb, max(8, (bp8 // 2) // 8 * 8))
    bp = _round_up(B, tb)
    grid = (bp // tb,)

    # Phase packing x4[b, v, r] = x[b, 4v + r] in the *source* dtype (no up-cast).
    x4 = x.reshape(B, useq, 4)
    if bp != B:
        x4 = jnp.concatenate([x4, jnp.zeros((bp - B, useq, 4), x4.dtype)], axis=0)

    flops = 2 * bp * useq * (_WIN * kcat + kcat * nch + nch * _ZW)
    bytes_accessed = (x4.size * x4.dtype.itemsize + bp * useq * 4
                      + (w1cat.size + w2cat.size + w3cat.size) * mxu_bytes
                      + (b1cat.size + b2k.size + b3k.size) * 4)

    out = pl.pallas_call(
        _encoder_kernel,
        out_shape=jax.ShapeDtypeStruct((bp, useq), f32),
        grid=grid,
        in_specs=[
            pl.BlockSpec((tb, useq, 4), lambda i: (i, 0, 0)),
            pl.BlockSpec((_WIN, kcat), lambda i: (0, 0)),    # resident fused weights
            pl.BlockSpec((1, kcat), lambda i: (0, 0)),
            pl.BlockSpec((kcat, nch), lambda i: (0, 0)),
            pl.BlockSpec((1, nch), lambda i: (0, 0)),
            pl.BlockSpec((nch, _ZW), lambda i: (0, 0)),
            pl.BlockSpec((1, 1), lambda i: (0, 0)),
        ],
        # Lane-dense for production L (useq multiple of 128); masked only for toy L.
        out_specs=pl.BlockSpec((tb, useq), lambda i: (i, 0)),
        scratch_shapes=[
            pltpu.VMEM((tb, useq + 2 * _PAD, 4), f32),       # zero-bordered x4
            pltpu.VMEM((tb, useq + 2 * _PAD, _ZW), f32),     # zero-bordered layer-3 taps
        ],
        compiler_params=pltpu.CompilerParams(
            dimension_semantics=("parallel",),
            vmem_limit_bytes=64 * 1024 * 1024),
        cost_estimate=pl.CostEstimate(flops=int(flops), transcendentals=0,
                                      bytes_accessed=int(bytes_accessed)),
    )(x4, w1cat, b1cat, w2cat, b2k, w3cat, b3k)
    return out[:B]


def encoder_reference(x, params):
    """Pure-JAX reference of MyEncoder.forward (NCH Conv1d stack)."""
    w1, b1, w2, b2, w3, b3 = params
    if x.ndim == 2:
        x = x[:, None, :]

    def conv(h, w, b, stride, pad):
        out = lax.conv_general_dilated(
            h, w, window_strides=(stride,), padding=[(pad, pad)],
            dimension_numbers=("NCH", "OIH", "NCH"),
            precision=lax.Precision.HIGHEST)
        return out + b[None, :, None]

    h = jax.nn.relu(conv(x, w1, b1, 2, 2))
    h = jax.nn.relu(conv(h, w2, b2, 2, 2))
    h = conv(h, w3, b3, 1, 1)
    return h.reshape(h.shape[0], -1)


def init_params(key, nlayers=3, nchannels=16):
    """torch.nn.Conv1d default init: uniform(+/- 1/sqrt(Cin*K)), torch layouts."""
    shapes = []
    for i in range(nlayers - 1):
        cin = 1 if i == 0 else nchannels
        shapes.append((nchannels, cin, 5))
    shapes.append((1, nchannels, 3))
    params = []
    for (cout, cin, k) in shapes:
        key, kw, kb = jax.random.split(key, 3)
        bound = 1.0 / float(cin * k) ** 0.5
        params.append(jax.random.uniform(kw, (cout, cin, k), jnp.float32, -bound, bound))
        params.append(jax.random.uniform(kb, (cout,), jnp.float32, -bound, bound))
    return tuple(params)


if __name__ == "__main__":
    key = jax.random.PRNGKey(0)
    kx, kp = jax.random.split(key)

    batch, length = 8, 128                # encoder output: [batch, length // 4]
    x = jax.random.normal(kx, (batch, length), jnp.float32)
    params = init_params(kp, nlayers=3, nchannels=16)

    ref = encoder_reference(x, params)

    # 1) exactness of the fused-matmul formulation (f32 MXU operands).
    out_f32 = jax.block_until_ready(my_encoder(x, params, mxu_dtype=jnp.float32))
    assert out_f32.shape == (batch, length // 4), out_f32.shape
    err32 = float(jnp.max(jnp.abs(out_f32 - ref)))
    assert err32 < 1e-3, f"f32 path: max abs error vs reference: {err32}"

    # 2) default fast path: bf16 MXU operands, f32 accumulation (expected ~1e-3 err).
    out = jax.block_until_ready(my_encoder(x, params))
    assert out.shape == (batch, length // 4), out.shape
    err16 = float(jnp.max(jnp.abs(out - ref)))
    assert err16 < 5e-2, f"bf16 path: max abs error vs reference: {err16}"

    print("KERNEL_OK")
</pallas_src>

<mosaic_0001>
module attributes {stable_mosaic.version = 11 : i64} {
  func.func @_encoder_kernel(%arg0: i32, %arg1: memref<8x32x4xf32, #tpu.memory_space<vmem>>, %arg2: memref<16x80xf32, #tpu.memory_space<vmem>>, %arg3: memref<1x80xf32, #tpu.memory_space<vmem>>, %arg4: memref<80x16xf32, #tpu.memory_space<vmem>>, %arg5: memref<1x16xf32, #tpu.memory_space<vmem>>, %arg6: memref<16x8xf32, #tpu.memory_space<vmem>>, %arg7: memref<1x1xf32, #tpu.memory_space<vmem>>, %arg8: memref<8x32xf32, #tpu.memory_space<vmem>>, %arg9: memref<8x48x4xf32, #tpu.memory_space<vmem>>, %arg10: memref<8x48x8xf32, #tpu.memory_space<vmem>>) attributes {dimension_semantics = [#tpu.dimension_semantics<parallel>], iteration_bounds = array<i64: 1>, scalar_prefetch = 0 : i64, scratch_operands = 2 : i64, tpu.core_type = #tpu.core_type<tc>, window_params = [{transform_indices = @transform_0, window_bounds = array<i64: 8, 32, 4>}, {pipeline_mode = #tpu.pipeline_mode<synchronous>, transform_indices = @transform_1, window_bounds = array<i64: 16, 80>}, {pipeline_mode = #tpu.pipeline_mode<synchronous>, transform_indices = @transform_2, window_bounds = array<i64: 1, 80>}, {pipeline_mode = #tpu.pipeline_mode<synchronous>, transform_indices = @transform_3, window_bounds = array<i64: 80, 16>}, {pipeline_mode = #tpu.pipeline_mode<synchronous>, transform_indices = @transform_4, window_bounds = array<i64: 1, 16>}, {pipeline_mode = #tpu.pipeline_mode<synchronous>, transform_indices = @transform_5, window_bounds = array<i64: 16, 8>}, {pipeline_mode = #tpu.pipeline_mode<synchronous>, transform_indices = @transform_6, window_bounds = array<i64: 1, 1>}, {transform_indices = @transform_7, window_bounds = array<i64: 8, 32>}]} {
    %c0 = arith.constant 0 : index
    %c0_0 = arith.constant 0 : index
    %c0_1 = arith.constant 0 : index
    %0 = vector.load %arg1[%c0, %c0_0, %c0_1] : memref<8x32x4xf32, #tpu.memory_space<vmem>>, vector<8x32x4xf32>
    %cst = arith.constant 0.000000e+00 : f32
    %1 = vector.broadcast %cst : f32 to vector<8x8x4xf32>
    %c0_2 = arith.constant 0 : index
    %c0_3 = arith.constant 0 : index
    %c0_4 = arith.constant 0 : index
    %2 = vector.load %arg9[%c0_2, %c0_3, %c0_4] : memref<8x48x4xf32, #tpu.memory_space<vmem>>, vector<8x8x4xf32>
    tpu.vector_store %arg9[%c0_2, %c0_3, %c0_4], %1 {strides = array<i32>} : memref<8x48x4xf32, #tpu.memory_space<vmem>>, vector<8x8x4xf32>,
    %cst_5 = arith.constant 0.000000e+00 : f32
    %3 = vector.broadcast %cst_5 : f32 to vector<8x8x4xf32>
    %c0_6 = arith.constant 0 : index
    %c40 = arith.constant 40 : index
    %c0_7 = arith.constant 0 : index
    %4 = vector.load %arg9[%c0_6, %c40, %c0_7] : memref<8x48x4xf32, #tpu.memory_space<vmem>>, vector<8x8x4xf32>
    tpu.vector_store %arg9[%c0_6, %c40, %c0_7], %3 {strides = array<i32>} : memref<8x48x4xf32, #tpu.memory_space<vmem>>, vector<8x8x4xf32>,
    %c0_8 = arith.constant 0 : index
    %c8 = arith.constant 8 : index
    %c0_9 = arith.constant 0 : index
    %5 = vector.load %arg9[%c0_8, %c8, %c0_9] : memref<8x48x4xf32, #tpu.memory_space<vmem>>, vector<8x32x4xf32>
    tpu.vector_store %arg9[%c0_8, %c8, %c0_9], %0 {strides = array<i32>} : memref<8x48x4xf32, #tpu.memory_space<vmem>>, vector<8x32x4xf32>,
    %c0_10 = arith.constant 0 : index
    %c6 = arith.constant 6 : index
    %c0_11 = arith.constant 0 : index
    %6 = vector.load %arg9[%c0_10, %c6, %c0_11] : memref<8x48x4xf32, #tpu.memory_space<vmem>>, vector<8x32x4xf32>
    %c0_12 = arith.constant 0 : index
    %c7 = arith.constant 7 : index
    %c0_13 = arith.constant 0 : index
    %7 = vector.load %arg9[%c0_12, %c7, %c0_13] : memref<8x48x4xf32, #tpu.memory_space<vmem>>, vector<8x32x4xf32>
    %c0_14 = arith.constant 0 : index
    %c9 = arith.constant 9 : index
    %c0_15 = arith.constant 0 : index
    %8 = vector.load %arg9[%c0_14, %c9, %c0_15] : memref<8x48x4xf32, #tpu.memory_space<vmem>>, vector<8x32x4xf32>
    %9 = tpu.concatenate %6, %7, %0, %8 in 2 : vector<8x32x4xf32>, vector<8x32x4xf32>, vector<8x32x4xf32>, vector<8x32x4xf32> -> vector<8x32x16xf32>
    %10 = vector.shape_cast %9 : vector<8x32x16xf32> to vector<256x16xf32>
    %c0_16 = arith.constant 0 : index
    %c0_17 = arith.constant 0 : index
    %11 = vector.load %arg2[%c0_16, %c0_17] : memref<16x80xf32, #tpu.memory_space<vmem>>, vector<16x80xf32>
    %cst_18 = arith.constant dense<0.000000e+00> : vector<256x80xf32>
    %12 = tpu.matmul %10, %11, %cst_18 {dimension_numbers = #tpu.dot_dimension_numbers<[1], [0], [0], [1], [0, 0, 1, 1], [], []>} : vector<256x16xf32>, vector<16x80xf32>, vector<256x80xf32> -> vector<256x80xf32>
    %c0_19 = arith.constant 0 : index
    %c0_20 = arith.constant 0 : index
    %13 = vector.load %arg3[%c0_19, %c0_20] : memref<1x80xf32, #tpu.memory_space<vmem>>, vector<1x80xf32>
    %14 = vector.broadcast %13 : vector<1x80xf32> to vector<256x80xf32>
    %15 = arith.addf %12, %14 : vector<256x80xf32>
    %cst_21 = arith.constant 0.000000e+00 : f32
    %16 = vector.broadcast %cst_21 : f32 to vector<256x80xf32>
    %17 = arith.maximumf %15, %16 : vector<256x80xf32>
    %18 = vector.shape_cast %17 : vector<256x80xf32> to vector<8x32x80xf32>
    %19 = tpu.iota {dimensions = array<i32: 1>} : vector<8x32x80xi32>
    %20 = tpu.iota {dimensions = array<i32: 2>} : vector<8x32x80xi32>
    %c0_i32 = arith.constant 0 : i32
    %21 = vector.broadcast %c0_i32 : i32 to vector<8x32x80xi32>
    %22 = arith.cmpi eq, %19, %21 : vector<8x32x80xi32>
    %c32_i32 = arith.constant 32 : i32
    %23 = vector.broadcast %c32_i32 : i32 to vector<8x32x80xi32>
    %24 = arith.cmpi slt, %20, %23 : vector<8x32x80xi32>
    %25 = arith.andi %22, %24 : vector<8x32x80xi1>
    %c31_i32 = arith.constant 31 : i32
    %26 = vector.broadcast %c31_i32 : i32 to vector<8x32x80xi32>
    %27 = arith.cmpi eq, %19, %26 : vector<8x32x80xi32>
    %c64_i32 = arith.constant 64 : i32
    %28 = vector.broadcast %c64_i32 : i32 to vector<8x32x80xi32>
    %29 = arith.cmpi sge, %20, %28 : vector<8x32x80xi32>
    %30 = arith.andi %27, %29 : vector<8x32x80xi1>
    %31 = arith.ori %25, %30 : vector<8x32x80xi1>
    %cst_22 = arith.constant 0.000000e+00 : f32
    %32 = vector.broadcast %cst_22 : f32 to vector<8x32x80xf32>
    %33 = arith.select %31, %32, %18 : vector<8x32x80xi1>, vector<8x32x80xf32>
    %34 = vector.shape_cast %33 : vector<8x32x80xf32> to vector<256x80xf32>
    %c0_23 = arith.constant 0 : index
    %c0_24 = arith.constant 0 : index
    %35 = vector.load %arg4[%c0_23, %c0_24] : memref<80x16xf32, #tpu.memory_space<vmem>>, vector<80x16xf32>
    %cst_25 = arith.constant dense<0.000000e+00> : vector<256x16xf32>
    %36 = tpu.matmul %34, %35, %cst_25 {dimension_numbers = #tpu.dot_dimension_numbers<[1], [0], [0], [1], [0, 0, 1, 1], [], []>} : vector<256x80xf32>, vector<80x16xf32>, vector<256x16xf32> -> vector<256x16xf32>
    %c0_26 = arith.constant 0 : index
    %c0_27 = arith.constant 0 : index
    %37 = vector.load %arg5[%c0_26, %c0_27] : memref<1x16xf32, #tpu.memory_space<vmem>>, vector<1x16xf32>
    %38 = vector.broadcast %37 : vector<1x16xf32> to vector<256x16xf32>
    %39 = arith.addf %36, %38 : vector<256x16xf32>
    %cst_28 = arith.constant 0.000000e+00 : f32
    %40 = vector.broadcast %cst_28 : f32 to vector<256x16xf32>
    %41 = arith.maximumf %39, %40 : vector<256x16xf32>
    %c0_29 = arith.constant 0 : index
    %c0_30 = arith.constant 0 : index
    %42 = vector.load %arg6[%c0_29, %c0_30] : memref<16x8xf32, #tpu.memory_space<vmem>>, vector<16x8xf32>
    %cst_31 = arith.constant dense<0.000000e+00> : vector<256x8xf32>
    %43 = tpu.matmul %41, %42, %cst_31 {dimension_numbers = #tpu.dot_dimension_numbers<[1], [0], [0], [1], [0, 0, 1, 1], [], []>} : vector<256x16xf32>, vector<16x8xf32>, vector<256x8xf32> -> vector<256x8xf32>
    %44 = vector.shape_cast %43 : vector<256x8xf32> to vector<8x32x8xf32>
    %cst_32 = arith.constant 0.000000e+00 : f32
    %45 = vector.broadcast %cst_32 : f32 to vector<8x8x8xf32>
    %c0_33 = arith.constant 0 : index
    %c0_34 = arith.constant 0 : index
    %c0_35 = arith.constant 0 : index
    %46 = vector.load %arg10[%c0_33, %c0_34, %c0_35] : memref<8x48x8xf32, #tpu.memory_space<vmem>>, vector<8x8x8xf32>
    tpu.vector_store %arg10[%c0_33, %c0_34, %c0_35], %45 {strides = array<i32>} : memref<8x48x8xf32, #tpu.memory_space<vmem>>, vector<8x8x8xf32>,
    %cst_36 = arith.constant 0.000000e+00 : f32
    %47 = vector.broadcast %cst_36 : f32 to vector<8x8x8xf32>
    %c0_37 = arith.constant 0 : index
    %c40_38 = arith.constant 40 : index
    %c0_39 = arith.constant 0 : index
    %48 = vector.load %arg10[%c0_37, %c40_38, %c0_39] : memref<8x48x8xf32, #tpu.memory_space<vmem>>, vector<8x8x8xf32>
    tpu.vector_store %arg10[%c0_37, %c40_38, %c0_39], %47 {strides = array<i32>} : memref<8x48x8xf32, #tpu.memory_space<vmem>>, vector<8x8x8xf32>,
    %c0_40 = arith.constant 0 : index
    %c8_41 = arith.constant 8 : index
    %c0_42 = arith.constant 0 : index
    %49 = vector.load %arg10[%c0_40, %c8_41, %c0_42] : memref<8x48x8xf32, #tpu.memory_space<vmem>>, vector<8x32x8xf32>
    tpu.vector_store %arg10[%c0_40, %c8_41, %c0_42], %44 {strides = array<i32>} : memref<8x48x8xf32, #tpu.memory_space<vmem>>, vector<8x32x8xf32>,
    %50 = tpu.iota {dimensions = array<i32: 2>} : vector<8x32x8xi32>
    %c0_i32_43 = arith.constant 0 : i32
    %51 = vector.broadcast %c0_i32_43 : i32 to vector<8x32x8xi32>
    %52 = arith.cmpi eq, %50, %51 : vector<8x32x8xi32>
    %c0_44 = arith.constant 0 : index
    %c7_45 = arith.constant 7 : index
    %c0_46 = arith.constant 0 : index
    %53 = vector.load %arg10[%c0_44, %c7_45, %c0_46] : memref<8x48x8xf32, #tpu.memory_space<vmem>>, vector<8x32x8xf32>
    %cst_47 = arith.constant 0.000000e+00 : f32
    %54 = vector.broadcast %cst_47 : f32 to vector<8x32x8xf32>
    %55 = arith.select %52, %53, %54 : vector<8x32x8xi1>, vector<8x32x8xf32>
    %c1_i32 = arith.constant 1 : i32
    %56 = vector.broadcast %c1_i32 : i32 to vector<8x32x8xi32>
    %57 = arith.cmpi eq, %50, %56 : vector<8x32x8xi32>
    %cst_48 = arith.constant 0.000000e+00 : f32
    %58 = vector.broadcast %cst_48 : f32 to vector<8x32x8xf32>
    %59 = arith.select %57, %44, %58 : vector<8x32x8xi1>, vector<8x32x8xf32>
    %60 = arith.addf %55, %59 : vector<8x32x8xf32>
    %c2_i32 = arith.constant 2 : i32
    %61 = vector.broadcast %c2_i32 : i32 to vector<8x32x8xi32>
    %62 = arith.cmpi eq, %50, %61 : vector<8x32x8xi32>
    %c0_49 = arith.constant 0 : index
    %c9_50 = arith.constant 9 : index
    %c0_51 = arith.constant 0 : index
    %63 = vector.load %arg10[%c0_49, %c9_50, %c0_51] : memref<8x48x8xf32, #tpu.memory_space<vmem>>, vector<8x32x8xf32>
    %cst_52 = arith.constant 0.000000e+00 : f32
    %64 = vector.broadcast %cst_52 : f32 to vector<8x32x8xf32>
    %65 = arith.select %62, %63, %64 : vector<8x32x8xi1>, vector<8x32x8xf32>
    %66 = arith.addf %60, %65 : vector<8x32x8xf32>
    %cst_53 = arith.constant dense<0.000000e+00> : vector<8x32xf32>
    %67 = vector.multi_reduction <add>, %66, %cst_53 [2] : vector<8x32x8xf32> to vector<8x32xf32>
    %c0_54 = arith.constant 0 : index
    %c0_55 = arith.constant 0 : index
    %68 = vector.load %arg7[%c0_54, %c0_55] : memref<1x1xf32, #tpu.memory_space<vmem>>, vector<1x1xf32>
    %69 = vector.broadcast %68 : vector<1x1xf32> to vector<8x32xf32>
    %70 = arith.addf %67, %69 : vector<8x32xf32>
    %c0_56 = arith.constant 0 : index
    %c0_57 = arith.constant 0 : index
    %71 = vector.load %arg8[%c0_56, %c0_57] : memref<8x32xf32, #tpu.memory_space<vmem>>, vector<8x32xf32>
    tpu.vector_store %arg8[%c0_56, %c0_57], %70 {strides = array<i32>} : memref<8x32xf32, #tpu.memory_space<vmem>>, vector<8x32xf32>,
    return
  }
  func.func @transform_0(%arg0: i32) -> (i32, i32, i32) {
    %c0_i32 = arith.constant 0 : i32
    %c0_i32_0 = arith.constant 0 : i32
    %c0_i32_1 = arith.constant 0 : i32
    return %arg0, %c0_i32, %c0_i32_0 : i32, i32, i32
  }
  func.func @transform_1(%arg0: i32) -> (i32, i32) {
    %c0_i32 = arith.constant 0 : i32
    %c0_i32_0 = arith.constant 0 : i32
    %c0_i32_1 = arith.constant 0 : i32
    return %c0_i32, %c0_i32_0 : i32, i32
  }
  func.func @transform_2(%arg0: i32) -> (i32, i32) {
    %c0_i32 = arith.constant 0 : i32
    %c0_i32_0 = arith.constant 0 : i32
    %c0_i32_1 = arith.constant 0 : i32
    return %c0_i32, %c0_i32_0 : i32, i32
  }
  func.func @transform_3(%arg0: i32) -> (i32, i32) {
    %c0_i32 = arith.constant 0 : i32
    %c0_i32_0 = arith.constant 0 : i32
    %c0_i32_1 = arith.constant 0 : i32
    return %c0_i32, %c0_i32_0 : i32, i32
  }
  func.func @transform_4(%arg0: i32) -> (i32, i32) {
    %c0_i32 = arith.constant 0 : i32
    %c0_i32_0 = arith.constant 0 : i32
    %c0_i32_1 = arith.constant 0 : i32
    return %c0_i32, %c0_i32_0 : i32, i32
  }
  func.func @transform_5(%arg0: i32) -> (i32, i32) {
    %c0_i32 = arith.constant 0 : i32
    %c0_i32_0 = arith.constant 0 : i32
    %c0_i32_1 = arith.constant 0 : i32
    return %c0_i32, %c0_i32_0 : i32, i32
  }
  func.func @transform_6(%arg0: i32) -> (i32, i32) {
    %c0_i32 = arith.constant 0 : i32
    %c0_i32_0 = arith.constant 0 : i32
    %c0_i32_1 = arith.constant 0 : i32
    return %c0_i32, %c0_i32_0 : i32, i32
  }
  func.func @transform_7(%arg0: i32) -> (i32, i32) {
    %c0_i32 = arith.constant 0 : i32
    %c0_i32_0 = arith.constant 0 : i32
    return %arg0, %c0_i32 : i32, i32
  }
}

</mosaic_0001>

<llo_original>
// kernel: tpu_custom_call.1
$region0: #{tpu_custom_call.1}
  #allocation0 [shape = 'u32[]', space=smem, size = 0x4, offset = 0x4, fixed_abs, tag = 'smem constant byte address 0x4 - core index']
  #allocation1 [shape = 'u32[144,128]{1,0:T(1,128)}', space=vmem, size = 0x12000, scoped, tag = 'internal scratch']
  #allocation2 [shape = 'f32[8,48,4]{2,1,0:T(8,128)}', space=vmem, size = 0x30000, scoped, tag = 'scratch operand']
  #allocation3 [shape = 'f32[8,48,8]{2,1,0:T(8,128)}', space=vmem, size = 0x30000, scoped, tag = 'scratch operand']
  #allocation4 [shape = 'f32[1,1]{1,0:T(1,128)S(1)}', space=vmem, size = 0x200, scoped, tag = 'scoped memory for tpu_custom_call.1']
  %s0 = inlined_call_operand.hbm [shape: f32[8,32,4], index: 0, kind: input, shape index: {}]
  %s1 = inlined_call_operand.hbm [shape: f32[16,80], index: 1, kind: input, shape index: {}]
  %s2 = inlined_call_operand.hbm [shape: f32[1,80], index: 2, kind: input, shape index: {}]
  %s3 = inlined_call_operand.hbm [shape: f32[80,16], index: 3, kind: input, shape index: {}]
  %s4 = inlined_call_operand.hbm [shape: f32[1,16], index: 4, kind: input, shape index: {}]
  %s5 = inlined_call_operand.hbm [shape: f32[16,8], index: 5, kind: input, shape index: {}]
  %s6 = inlined_call_operand.<no memory space> [shape: f32[1,1], index: 6, kind: input, shape index: {}]
  %s7 = inlined_call_operand.hbm [shape: f32[8,32], index: 7, kind: output, shape index: {}]
  %s8 = sld [smem:[#allocation0]]
  $region62: #{tpu_custom_call.1} parent=0
    _
  %s10 = ssub.s32 1, %s8
  %s11 = scalar_select 0, %s10, %s8
  %v12 = vstv %s6
  %13 = vst [vmem:[#allocation4] sm:$0x1] %v12
  $region1: #{tpu_custom_call.1} parent=0
    #allocation5 [shape = 'u8[131072]{0}', space=vmem, size = 0x20000, scoped, tag = 'input window, operand 0, single buffered']
    #allocation6 [shape = 's32[1]{0}', space=sflag, size = 0x4, scoped, tag = 'scoped memory for tpu_custom_call.1']
    #allocation7 [shape = 's32[1]{0}', space=sflag, size = 0x4, scoped, tag = 'scoped memory for tpu_custom_call.1']
    #allocation8 [shape = 'u8[8192]{0}', space=vmem, size = 0x2000, scoped, tag = 'input window, operand 1, single buffered']
    #allocation9 [shape = 's32[1]{0}', space=sflag, size = 0x4, scoped, tag = 'scoped memory for tpu_custom_call.1']
    #allocation10 [shape = 'u8[512]{0}', space=vmem, size = 0x400, scoped, tag = 'input window, operand 2, single buffered']
    #allocation11 [shape = 'u8[40960]{0}', space=vmem, size = 0xa000, scoped, tag = 'input window, operand 3, single buffered']
    #allocation12 [shape = 's32[1]{0}', space=sflag, size = 0x4, scoped, tag = 'scoped memory for tpu_custom_call.1']
    #allocation13 [shape = 'u8[512]{0}', space=vmem, size = 0x400, scoped, tag = 'input window, operand 4, single buffered']
    #allocation14 [shape = 'u8[8192]{0}', space=vmem, size = 0x2000, scoped, tag = 'input window, operand 5, single buffered']
    #allocation15 [shape = 's32[1]{0}', space=sflag, size = 0x4, scoped, tag = 'scoped memory for tpu_custom_call.1']
    #allocation16 [shape = 'u8[4096]{0}', space=vmem, size = 0x1000, scoped, tag = 'output window, operand 0, single buffered']
    %14 = vsyncpa [#allocation6], 0
    %15 = vsyncpa [#allocation9], 0
    %16 = vsyncpa [#allocation12], 0
    %17 = vsyncpa [#allocation15], 0
    %18 = vsyncpa [#allocation7], 0
    // Predicated region
    $region2: #{tpu_custom_call.1} parent=1 // pred_check
      _
    $region3: #{tpu_custom_call.1} parent=1 // pred_check_branch
      %20 = sbr.rel (0) target = $region5
    $region4: #{tpu_custom_call.1} parent=1 // pred_region
      %s22 = ssub.s32 4096, 4096
      %23 = vsyncadd [#allocation6], %s22
      %s24 = sshll.u32 [#allocation5], 4
      %s25 = int_to_ptr.vmem [resolvable:$true] %s24
      %30 = dma.hbm_to_vmem [thread:$0]  %s0, 4096, %s25, [#allocation6], 128, 128, 8
    $region5: #{tpu_custom_call.1} parent=1 // pred_fallthru
      _
    // Predicated region
    $region6: #{tpu_custom_call.1} parent=1 // pred_check
      _
    $region7: #{tpu_custom_call.1} parent=1 // pred_check_branch
      %32 = sbr.rel (0) target = $region9
    $region8: #{tpu_custom_call.1} parent=1 // pred_region
      %s34 = ssub.s32 256, 256
      %35 = vsyncadd [#allocation9], %s34
      %s36 = sshll.u32 [#allocation8], 4
      %s37 = int_to_ptr.vmem [resolvable:$true] %s36
      %42 = dma.hbm_to_vmem [thread:$0]  %s1, 256, %s37, [#allocation9], 128, 128, 8
    $region9: #{tpu_custom_call.1} parent=1 // pred_fallthru
      _
    // Predicated region
    $region10: #{tpu_custom_call.1} parent=1 // pred_check
      _
    $region11: #{tpu_custom_call.1} parent=1 // pred_check_branch
      %44 = sbr.rel (0) target = $region13
    $region12: #{tpu_custom_call.1} parent=1 // pred_region
      %s46 = ssub.s32 16, 16
      %47 = vsyncadd [#allocation9], %s46
      %s49 = sshll.u32 [#allocation10], 4
      %s50 = int_to_ptr.vmem [resolvable:$true] %s49
      %52 = dma.hbm_to_vmem [thread:$0]  %s2, 16, %s50, [#allocation9]
    $region13: #{tpu_custom_call.1} parent=1 // pred_fallthru
      _
    // Predicated region
    $region14: #{tpu_custom_call.1} parent=1 // pred_check
      _
    $region15: #{tpu_custom_call.1} parent=1 // pred_check_branch
      %54 = sbr.rel (0) target = $region17
    $region16: #{tpu_custom_call.1} parent=1 // pred_region
      %s56 = ssub.s32 1280, 1280
      %57 = vsyncadd [#allocation12], %s56
      %s58 = sshll.u32 [#allocation11], 4
      %s59 = int_to_ptr.vmem [resolvable:$true] %s58
      %64 = dma.hbm_to_vmem [thread:$0]  %s3, 1280, %s59, [#allocation12], 128, 128, 8
    $region17: #{tpu_custom_call.1} parent=1 // pred_fallthru
      _
    // Predicated region
    $region18: #{tpu_custom_call.1} parent=1 // pred_check
      _
    $region19: #{tpu_custom_call.1} parent=1 // pred_check_branch
      %66 = sbr.rel (0) target = $region21
    $region20: #{tpu_custom_call.1} parent=1 // pred_region
      %s68 = ssub.s32 16, 16
      %69 = vsyncadd [#allocation12], %s68
      %s71 = sshll.u32 [#allocation13], 4
      %s72 = int_to_ptr.vmem [resolvable:$true] %s71
      %74 = dma.hbm_to_vmem [thread:$0]  %s4, 16, %s72, [#allocation12]
    $region21: #{tpu_custom_call.1} parent=1 // pred_fallthru
      _
    // Predicated region
    $region22: #{tpu_custom_call.1} parent=1 // pred_check
      _
    $region23: #{tpu_custom_call.1} parent=1 // pred_check_branch
      %76 = sbr.rel (0) target = $region25
    $region24: #{tpu_custom_call.1} parent=1 // pred_region
      %s78 = ssub.s32 256, 256
      %79 = vsyncadd [#allocation15], %s78
      %s80 = sshll.u32 [#allocation14], 4
      %s81 = int_to_ptr.vmem [resolvable:$true] %s80
      %86 = dma.hbm_to_vmem [thread:$0]  %s5, 256, %s81, [#allocation15], 128, 128, 8
    $region25: #{tpu_custom_call.1} parent=1 // pred_fallthru
      _
    // Predicated region
    $region26: #{tpu_custom_call.1} parent=1 // pred_check
      _
    $region27: #{tpu_custom_call.1} parent=1 // pred_check_branch
      %88 = sbr.rel (0) target = $region29
    $region28: #{tpu_custom_call.1} parent=1 // pred_region
      _
    $region29: #{tpu_custom_call.1} parent=1 // pred_fallthru
      _
    // Predicated region
    $region30: #{tpu_custom_call.1} parent=1 // pred_check
      _
    $region31: #{tpu_custom_call.1} parent=1 // pred_check_branch
      %90 = sbr.rel (0) target = $region33
    $region32: #{tpu_custom_call.1} parent=1 // pred_region
      %91 = dma.done [#allocation6], 4096
    $region33: #{tpu_custom_call.1} parent=1 // pred_fallthru
      _
    // Predicated region
    $region34: #{tpu_custom_call.1} parent=1 // pred_check
      _
    $region35: #{tpu_custom_call.1} parent=1 // pred_check_branch
      %93 = sbr.rel (0) target = $region37
    $region36: #{tpu_custom_call.1} parent=1 // pred_region
      %94 = dma.done [#allocation9], 256
    $region37: #{tpu_custom_call.1} parent=1 // pred_fallthru
      _
    // Predicated region
    $region38: #{tpu_custom_call.1} parent=1 // pred_check
      _
    $region39: #{tpu_custom_call.1} parent=1 // pred_check_branch
      %96 = sbr.rel (0) target = $region41
    $region40: #{tpu_custom_call.1} parent=1 // pred_region
      %97 = dma.done [#allocation9], 16
    $region41: #{tpu_custom_call.1} parent=1 // pred_fallthru
      _
    // Predicated region
    $region42: #{tpu_custom_call.1} parent=1 // pred_check
      _
    $region43: #{tpu_custom_call.1} parent=1 // pred_check_branch
      %99 = sbr.rel (0) target = $region45
    $region44: #{tpu_custom_call.1} parent=1 // pred_region
      %100 = dma.done [#allocation12], 1280
    $region45: #{tpu_custom_call.1} parent=1 // pred_fallthru
      _
    // Predicated region
    $region46: #{tpu_custom_call.1} parent=1 // pred_check
      _
    $region47: #{tpu_custom_call.1} parent=1 // pred_check_branch
      %102 = sbr.rel (0) target = $region49
    $region48: #{tpu_custom_call.1} parent=1 // pred_region
      %103 = dma.done [#allocation12], 16
    $region49: #{tpu_custom_call.1} parent=1 // pred_fallthru
      _
    // Predicated region
    $region50: #{tpu_custom_call.1} parent=1 // pred_check
      _
    $region51: #{tpu_custom_call.1} parent=1 // pred_check_branch
      %105 = sbr.rel (0) target = $region53
    $region52: #{tpu_custom_call.1} parent=1 // pred_region
      %106 = dma.done [#allocation15], 256
    $region53: #{tpu_custom_call.1} parent=1 // pred_fallthru
      _
    %v107 = vld [vmem:[#allocation5] sm:$0xff]
    %v108 = vld [vmem:[#allocation5 + $0x8] sm:$0xff]
    %v109 = vld [vmem:[#allocation5 + $0x10] sm:$0xff]
    %v110 = vld [vmem:[#allocation5 + $0x18] sm:$0xff]
    %v111 = vld [vmem:[#allocation5 + $0x20] sm:$0xff]
    %v112 = vld [vmem:[#allocation5 + $0x28] sm:$0xff]
    %v113 = vld [vmem:[#allocation5 + $0x30] sm:$0xff]
    %v114 = vld [vmem:[#allocation5 + $0x38] sm:$0xff]
    %v115 = vld [vmem:[#allocation5 + $0x40] sm:$0xff]
    %v116 = vld [vmem:[#allocation5 + $0x48] sm:$0xff]
    %v117 = vld [vmem:[#allocation5 + $0x50] sm:$0xff]
    %v118 = vld [vmem:[#allocation5 + $0x58] sm:$0xff]
    %v119 = vld [vmem:[#allocation5 + $0x60] sm:$0xff]
    %v120 = vld [vmem:[#allocation5 + $0x68] sm:$0xff]
    %v121 = vld [vmem:[#allocation5 + $0x70] sm:$0xff]
    %v122 = vld [vmem:[#allocation5 + $0x78] sm:$0xff]
    %v123 = vld [vmem:[#allocation5 + $0x80] sm:$0xff]
    %v124 = vld [vmem:[#allocation5 + $0x88] sm:$0xff]
    %v125 = vld [vmem:[#allocation5 + $0x90] sm:$0xff]
    %v126 = vld [vmem:[#allocation5 + $0x98] sm:$0xff]
    %v127 = vld [vmem:[#allocation5 + $0xa0] sm:$0xff]
    %v128 = vld [vmem:[#allocation5 + $0xa8] sm:$0xff]
    %v129 = vld [vmem:[#allocation5 + $0xb0] sm:$0xff]
    %v130 = vld [vmem:[#allocation5 + $0xb8] sm:$0xff]
    %v131 = vld [vmem:[#allocation5 + $0xc0] sm:$0xff]
    %v132 = vld [vmem:[#allocation5 + $0xc8] sm:$0xff]
    %v133 = vld [vmem:[#allocation5 + $0xd0] sm:$0xff]
    %v134 = vld [vmem:[#allocation5 + $0xd8] sm:$0xff]
    %v135 = vld [vmem:[#allocation5 + $0xe0] sm:$0xff]
    %v136 = vld [vmem:[#allocation5 + $0xe8] sm:$0xff]
    %v137 = vld [vmem:[#allocation5 + $0xf0] sm:$0xff]
    %v138 = vld [vmem:[#allocation5 + $0xf8] sm:$0xff]
    %vm139 = vcmask 31744
    %140 = vst.msk [vmem:[#allocation2] sm:$0xff] %vm139, 0.0
    %141 = vst.msk [vmem:[#allocation2 + $0x30] sm:$0xff] %vm139, 0.0
    %142 = vst.msk [vmem:[#allocation2 + $0x60] sm:$0xff] %vm139, 0.0
    %143 = vst.msk [vmem:[#allocation2 + $0x90] sm:$0xff] %vm139, 0.0
    %144 = vst.msk [vmem:[#allocation2 + $0xc0] sm:$0xff] %vm139, 0.0
    %145 = vst.msk [vmem:[#allocation2 + $0xf0] sm:$0xff] %vm139, 0.0
    %146 = vst.msk [vmem:[#allocation2 + $0x120] sm:$0xff] %vm139, 0.0
    %147 = vst.msk [vmem:[#allocation2 + $0x150] sm:$0xff] %vm139, 0.0
    %148 = vst.msk [vmem:[#allocation2 + $0x28] sm:$0xff] %vm139, 0.0
    %149 = vst.msk [vmem:[#allocation2 + $0x58] sm:$0xff] %vm139, 0.0
    %150 = vst.msk [vmem:[#allocation2 + $0x88] sm:$0xff] %vm139, 0.0
    %151 = vst.msk [vmem:[#allocation2 + $0xb8] sm:$0xff] %vm139, 0.0
    %152 = vst.msk [vmem:[#allocation2 + $0xe8] sm:$0xff] %vm139, 0.0
    %153 = vst.msk [vmem:[#allocation2 + $0x118] sm:$0xff] %vm139, 0.0
    %154 = vst.msk [vmem:[#allocation2 + $0x148] sm:$0xff] %vm139, 0.0
    %155 = vst.msk [vmem:[#allocation2 + $0x178] sm:$0xff] %vm139, 0.0
    %156 = vst.msk [vmem:[#allocation2 + $0x8] sm:$0xff] %vm139, %v107
    %157 = vst.msk [vmem:[#allocation2 + $0x10] sm:$0xff] %vm139, %v108
    %158 = vst.msk [vmem:[#allocation2 + $0x18] sm:$0xff] %vm139, %v109
    %159 = vst.msk [vmem:[#allocation2 + $0x20] sm:$0xff] %vm139, %v110
    %160 = vst.msk [vmem:[#allocation2 + $0x38] sm:$0xff] %vm139, %v111
    %161 = vst.msk [vmem:[#allocation2 + $0x40] sm:$0xff] %vm139, %v112
    %162 = vst.msk [vmem:[#allocation2 + $0x48] sm:$0xff] %vm139, %v113
    %163 = vst.msk [vmem:[#allocation2 + $0x50] sm:$0xff] %vm139, %v114
    %164 = vst.msk [vmem:[#allocation2 + $0x68] sm:$0xff] %vm139, %v115
    %165 = vst.msk [vmem:[#allocation2 + $0x70] sm:$0xff] %vm139, %v116
    %166 = vst.msk [vmem:[#allocation2 + $0x78] sm:$0xff] %vm139, %v117
    %167 = vst.msk [vmem:[#allocation2 + $0x80] sm:$0xff] %vm139, %v118
    %168 = vst.msk [vmem:[#allocation2 + $0x98] sm:$0xff] %vm139, %v119
    %169 = vst.msk [vmem:[#allocation2 + $0xa0] sm:$0xff] %vm139, %v120
    %170 = vst.msk [vmem:[#allocation2 + $0xa8] sm:$0xff] %vm139, %v121
    %171 = vst.msk [vmem:[#allocation2 + $0xb0] sm:$0xff] %vm139, %v122
    %172 = vst.msk [vmem:[#allocation2 + $0xc8] sm:$0xff] %vm139, %v123
    %173 = vst.msk [vmem:[#allocation2 + $0xd0] sm:$0xff] %vm139, %v124
    %174 = vst.msk [vmem:[#allocation2 + $0xd8] sm:$0xff] %vm139, %v125
    %175 = vst.msk [vmem:[#allocation2 + $0xe0] sm:$0xff] %vm139, %v126
    %176 = vst.msk [vmem:[#allocation2 + $0xf8] sm:$0xff] %vm139, %v127
    %177 = vst.msk [vmem:[#allocation2 + $0x100] sm:$0xff] %vm139, %v128
    %178 = vst.msk [vmem:[#allocation2 + $0x108] sm:$0xff] %vm139, %v129
    %179 = vst.msk [vmem:[#allocation2 + $0x110] sm:$0xff] %vm139, %v130
    %180 = vst.msk [vmem:[#allocation2 + $0x128] sm:$0xff] %vm139, %v131
    %181 = vst.msk [vmem:[#allocation2 + $0x130] sm:$0xff] %vm139, %v132
    %182 = vst.msk [vmem:[#allocation2 + $0x138] sm:$0xff] %vm139, %v133
    %183 = vst.msk [vmem:[#allocation2 + $0x140] sm:$0xff] %vm139, %v134
    %184 = vst.msk [vmem:[#allocation2 + $0x158] sm:$0xff] %vm139, %v135
    %185 = vst.msk [vmem:[#allocation2 + $0x160] sm:$0xff] %vm139, %v136
    %186 = vst.msk [vmem:[#allocation2 + $0x168] sm:$0xff] %vm139, %v137
    %187 = vst.msk [vmem:[#allocation2 + $0x170] sm:$0xff] %vm139, %v138
    %v188 = vld [vmem:[#allocation2 + $0x6] sm:$0xff]
    %v189 = vld [vmem:[#allocation2 + $0xe] sm:$0xff]
    %v190 = vld [vmem:[#allocation2 + $0x16] sm:$0xff]
    %v191 = vld [vmem:[#allocation2 + $0x1e] sm:$0xff]
    %v192 = vld [vmem:[#allocation2 + $0x36] sm:$0xff]
    %v193 = vld [vmem:[#allocation2 + $0x3e] sm:$0xff]
    %v194 = vld [vmem:[#allocation2 + $0x46] sm:$0xff]
    %v195 = vld [vmem:[#allocation2 + $0x4e] sm:$0xff]
    %v196 = vld [vmem:[#allocation2 + $0x66] sm:$0xff]
    %v197 = vld [vmem:[#allocation2 + $0x6e] sm:$0xff]
    %v198 = vld [vmem:[#allocation2 + $0x76] sm:$0xff]
    %v199 = vld [vmem:[#allocation2 + $0x7e] sm:$0xff]
    %v200 = vld [vmem:[#allocation2 + $0x96] sm:$0xff]
    %v201 = vld [vmem:[#allocation2 + $0x9e] sm:$0xff]
    %v202 = vld [vmem:[#allocation2 + $0xa6] sm:$0xff]
    %v203 = vld [vmem:[#allocation2 + $0xae] sm:$0xff]
    %v204 = vld [vmem:[#allocation2 + $0xc6] sm:$0xff]
    %v205 = vld [vmem:[#allocation2 + $0xce] sm:$0xff]
    %v206 = vld [vmem:[#allocation2 + $0xd6] sm:$0xff]
    %v207 = vld [vmem:[#allocation2 + $0xde] sm:$0xff]
    %v208 = vld [vmem:[#allocation2 + $0xf6] sm:$0xff]
    %v209 = vld [vmem:[#allocation2 + $0xfe] sm:$0xff]
    %v210 = vld [vmem:[#allocation2 + $0x106] sm:$0xff]
    %v211 = vld [vmem:[#allocation2 + $0x10e] sm:$0xff]
    %v212 = vld [vmem:[#allocation2 + $0x126] sm:$0xff]
    %v213 = vld [vmem:[#allocation2 + $0x12e] sm:$0xff]
    %v214 = vld [vmem:[#allocation2 + $0x136] sm:$0xff]
    %v215 = vld [vmem:[#allocation2 + $0x13e] sm:$0xff]
    %v216 = vld [vmem:[#allocation2 + $0x156] sm:$0xff]
    %v217 = vld [vmem:[#allocation2 + $0x15e] sm:$0xff]
    %v218 = vld [vmem:[#allocation2 + $0x166] sm:$0xff]
    %v219 = vld [vmem:[#allocation2 + $0x16e] sm:$0xff]
    %v220 = vld [vmem:[#allocation2 + $0x7] sm:$0xff]
    %v221 = vld [vmem:[#allocation2 + $0xf] sm:$0xff]
    %v222 = vld [vmem:[#allocation2 + $0x17] sm:$0xff]
    %v223 = vld [vmem:[#allocation2 + $0x1f] sm:$0xff]
    %v224 = vld [vmem:[#allocation2 + $0x37] sm:$0xff]
    %v225 = vld [vmem:[#allocation2 + $0x3f] sm:$0xff]
    %v226 = vld [vmem:[#allocation2 + $0x47] sm:$0xff]
    %v227 = vld [vmem:[#allocation2 + $0x4f] sm:$0xff]
    %v228 = vld [vmem:[#allocation2 + $0x67] sm:$0xff]
    %v229 = vld [vmem:[#allocation2 + $0x6f] sm:$0xff]
    %v230 = vld [vmem:[#allocation2 + $0x77] sm:$0xff]
    %v231 = vld [vmem:[#allocation2 + $0x7f] sm:$0xff]
    %v232 = vld [vmem:[#allocation2 + $0x97] sm:$0xff]
    %v233 = vld [vmem:[#allocation2 + $0x9f] sm:$0xff]
    %v234 = vld [vmem:[#allocation2 + $0xa7] sm:$0xff]
    %v235 = vld [vmem:[#allocation2 + $0xaf] sm:$0xff]
    %v236 = vld [vmem:[#allocation2 + $0xc7] sm:$0xff]
    %v237 = vld [vmem:[#allocation2 + $0xcf] sm:$0xff]
    %v238 = vld [vmem:[#allocation2 + $0xd7] sm:$0xff]
    %v239 = vld [vmem:[#allocation2 + $0xdf] sm:$0xff]
    %v240 = vld [vmem:[#allocation2 + $0xf7] sm:$0xff]
    %v241 = vld [vmem:[#allocation2 + $0xff] sm:$0xff]
    %v242 = vld [vmem:[#allocation2 + $0x107] sm:$0xff]
    %v243 = vld [vmem:[#allocation2 + $0x10f] sm:$0xff]
    %v244 = vld [vmem:[#allocation2 + $0x127] sm:$0xff]
    %v245 = vld [vmem:[#allocation2 + $0x12f] sm:$0xff]
    %v246 = vld [vmem:[#allocation2 + $0x137] sm:$0xff]
    %v247 = vld [vmem:[#allocation2 + $0x13f] sm:$0xff]
    %v248 = vld [vmem:[#allocation2 + $0x157] sm:$0xff]
    %v249 = vld [vmem:[#allocation2 + $0x15f] sm:$0xff]
    %v250 = vld [vmem:[#allocation2 + $0x167] sm:$0xff]
    %v251 = vld [vmem:[#allocation2 + $0x16f] sm:$0xff]
    %v252 = vld [vmem:[#allocation2 + $0x9] sm:$0xff]
    %v253 = vld [vmem:[#allocation2 + $0x11] sm:$0xff]
    %v254 = vld [vmem:[#allocation2 + $0x19] sm:$0xff]
    %v255 = vld [vmem:[#allocation2 + $0x21] sm:$0xff]
    %v256 = vld [vmem:[#allocation2 + $0x39] sm:$0xff]
    %v257 = vld [vmem:[#allocation2 + $0x41] sm:$0xff]
    %v258 = vld [vmem:[#allocation2 + $0x49] sm:$0xff]
    %v259 = vld [vmem:[#allocation2 + $0x51] sm:$0xff]
    %v260 = vld [vmem:[#allocation2 + $0x69] sm:$0xff]
    %v261 = vld [vmem:[#allocation2 + $0x71] sm:$0xff]
    %v262 = vld [vmem:[#allocation2 + $0x79] sm:$0xff]
    %v263 = vld [vmem:[#allocation2 + $0x81] sm:$0xff]
    %v264 = vld [vmem:[#allocation2 + $0x99] sm:$0xff]
    %v265 = vld [vmem:[#allocation2 + $0xa1] sm:$0xff]
    %v266 = vld [vmem:[#allocation2 + $0xa9] sm:$0xff]
    %v267 = vld [vmem:[#allocation2 + $0xb1] sm:$0xff]
    %v268 = vld [vmem:[#allocation2 + $0xc9] sm:$0xff]
    %v269 = vld [vmem:[#allocation2 + $0xd1] sm:$0xff]
    %v270 = vld [vmem:[#allocation2 + $0xd9] sm:$0xff]
    %v271 = vld [vmem:[#allocation2 + $0xe1] sm:$0xff]
    %v272 = vld [vmem:[#allocation2 + $0xf9] sm:$0xff]
    %v273 = vld [vmem:[#allocation2 + $0x101] sm:$0xff]
    %v274 = vld [vmem:[#allocation2 + $0x109] sm:$0xff]
    %v275 = vld [vmem:[#allocation2 + $0x111] sm:$0xff]
    %v276 = vld [vmem:[#allocation2 + $0x129] sm:$0xff]
    %v277 = vld [vmem:[#allocation2 + $0x131] sm:$0xff]
    %v278 = vld [vmem:[#allocation2 + $0x139] sm:$0xff]
    %v279 = vld [vmem:[#allocation2 + $0x141] sm:$0xff]
    %v280 = vld [vmem:[#allocation2 + $0x159] sm:$0xff]
    %v281 = vld [vmem:[#allocation2 + $0x161] sm:$0xff]
    %v282 = vld [vmem:[#allocation2 + $0x169] sm:$0xff]
    %v283 = vld [vmem:[#allocation2 + $0x171] sm:$0xff]
    %316 = vrot.lane.b32.xlu0 %v220, 4
    %v317 = vpop.permute.xlu0 %316
    %318 = vrot.lane.b32.xlu0 %v221, 4
    %v319 = vpop.permute.xlu0 %318
    %320 = vrot.lane.b32.xlu0 %v222, 4
    %v321 = vpop.permute.xlu0 %320
    %322 = vrot.lane.b32.xlu0 %v223, 4
    %v323 = vpop.permute.xlu0 %322
    %324 = vrot.lane.b32.xlu0 %v224, 4
    %v325 = vpop.permute.xlu0 %324
    %326 = vrot.lane.b32.xlu0 %v225, 4
    %v327 = vpop.permute.xlu0 %326
    %328 = vrot.lane.b32.xlu0 %v226, 4
    %v329 = vpop.permute.xlu0 %328
    %330 = vrot.lane.b32.xlu0 %v227, 4
    %v331 = vpop.permute.xlu0 %330
    %332 = vrot.lane.b32.xlu0 %v228, 4
    %v333 = vpop.permute.xlu0 %332
    %334 = vrot.lane.b32.xlu0 %v229, 4
    %v335 = vpop.permute.xlu0 %334
    %336 = vrot.lane.b32.xlu0 %v230, 4
    %v337 = vpop.permute.xlu0 %336
    %338 = vrot.lane.b32.xlu0 %v231, 4
    %v339 = vpop.permute.xlu0 %338
    %340 = vrot.lane.b32.xlu0 %v232, 4
    %v341 = vpop.permute.xlu0 %340
    %342 = vrot.lane.b32.xlu0 %v233, 4
    %v343 = vpop.permute.xlu0 %342
    %344 = vrot.lane.b32.xlu0 %v234, 4
    %v345 = vpop.permute.xlu0 %344
    %346 = vrot.lane.b32.xlu0 %v235, 4
    %v347 = vpop.permute.xlu0 %346
    %348 = vrot.lane.b32.xlu0 %v236, 4
    %v349 = vpop.permute.xlu0 %348
    %350 = vrot.lane.b32.xlu0 %v237, 4
    %v351 = vpop.permute.xlu0 %350
    %352 = vrot.lane.b32.xlu0 %v238, 4
    %v353 = vpop.permute.xlu0 %352
    %354 = vrot.lane.b32.xlu0 %v239, 4
    %v355 = vpop.permute.xlu0 %354
    %356 = vrot.lane.b32.xlu0 %v240, 4
    %v357 = vpop.permute.xlu0 %356
    %358 = vrot.lane.b32.xlu0 %v241, 4
    %v359 = vpop.permute.xlu0 %358
    %360 = vrot.lane.b32.xlu0 %v242, 4
    %v361 = vpop.permute.xlu0 %360
    %362 = vrot.lane.b32.xlu0 %v243, 4
    %v363 = vpop.permute.xlu0 %362
    %364 = vrot.lane.b32.xlu0 %v244, 4
    %v365 = vpop.permute.xlu0 %364
    %366 = vrot.lane.b32.xlu0 %v245, 4
    %v367 = vpop.permute.xlu0 %366
    %368 = vrot.lane.b32.xlu0 %v246, 4
    %v369 = vpop.permute.xlu0 %368
    %370 = vrot.lane.b32.xlu0 %v247, 4
    %v371 = vpop.permute.xlu0 %370
    %372 = vrot.lane.b32.xlu0 %v248, 4
    %v373 = vpop.permute.xlu0 %372
    %374 = vrot.lane.b32.xlu0 %v249, 4
    %v375 = vpop.permute.xlu0 %374
    %376 = vrot.lane.b32.xlu0 %v250, 4
    %v377 = vpop.permute.xlu0 %376
    %378 = vrot.lane.b32.xlu0 %v251, 4
    %v379 = vpop.permute.xlu0 %378
    %444 = vrot.lane.b32.xlu0 %v107, 8
    %v445 = vpop.permute.xlu0 %444
    %446 = vrot.lane.b32.xlu0 %v108, 8
    %v447 = vpop.permute.xlu0 %446
    %448 = vrot.lane.b32.xlu0 %v109, 8
    %v449 = vpop.permute.xlu0 %448
    %450 = vrot.lane.b32.xlu0 %v110, 8
    %v451 = vpop.permute.xlu0 %450
    %452 = vrot.lane.b32.xlu0 %v111, 8
    %v453 = vpop.permute.xlu0 %452
    %454 = vrot.lane.b32.xlu0 %v112, 8
    %v455 = vpop.permute.xlu0 %454
    %456 = vrot.lane.b32.xlu0 %v113, 8
    %v457 = vpop.permute.xlu0 %456
    %458 = vrot.lane.b32.xlu0 %v114, 8
    %v459 = vpop.permute.xlu0 %458
    %460 = vrot.lane.b32.xlu0 %v115, 8
    %v461 = vpop.permute.xlu0 %460
    %462 = vrot.lane.b32.xlu0 %v116, 8
    %v463 = vpop.permute.xlu0 %462
    %464 = vrot.lane.b32.xlu0 %v117, 8
    %v465 = vpop.permute.xlu0 %464
    %466 = vrot.lane.b32.xlu0 %v118, 8
    %v467 = vpop.permute.xlu0 %466
    %468 = vrot.lane.b32.xlu0 %v119, 8
    %v469 = vpop.permute.xlu0 %468
    %470 = vrot.lane.b32.xlu0 %v120, 8
    %v471 = vpop.permute.xlu0 %470
    %472 = vrot.lane.b32.xlu0 %v121, 8
    %v473 = vpop.permute.xlu0 %472
    %474 = vrot.lane.b32.xlu0 %v122, 8
    %v475 = vpop.permute.xlu0 %474
    %476 = vrot.lane.b32.xlu0 %v123, 8
    %v477 = vpop.permute.xlu0 %476
    %478 = vrot.lane.b32.xlu0 %v124, 8
    %v479 = vpop.permute.xlu0 %478
    %480 = vrot.lane.b32.xlu0 %v125, 8
    %v481 = vpop.permute.xlu0 %480
    %482 = vrot.lane.b32.xlu0 %v126, 8
    %v483 = vpop.permute.xlu0 %482
    %484 = vrot.lane.b32.xlu0 %v127, 8
    %v485 = vpop.permute.xlu0 %484
    %486 = vrot.lane.b32.xlu0 %v128, 8
    %v487 = vpop.permute.xlu0 %486
    %488 = vrot.lane.b32.xlu0 %v129, 8
    %v489 = vpop.permute.xlu0 %488
    %490 = vrot.lane.b32.xlu0 %v130, 8
    %v491 = vpop.permute.xlu0 %490
    %492 = vrot.lane.b32.xlu0 %v131, 8
    %v493 = vpop.permute.xlu0 %492
    %494 = vrot.lane.b32.xlu0 %v132, 8
    %v495 = vpop.permute.xlu0 %494
    %496 = vrot.lane.b32.xlu0 %v133, 8
    %v497 = vpop.permute.xlu0 %496
    %498 = vrot.lane.b32.xlu0 %v134, 8
    %v499 = vpop.permute.xlu0 %498
    %500 = vrot.lane.b32.xlu0 %v135, 8
    %v501 = vpop.permute.xlu0 %500
    %502 = vrot.lane.b32.xlu0 %v136, 8
    %v503 = vpop.permute.xlu0 %502
    %504 = vrot.lane.b32.xlu0 %v137, 8
    %v505 = vpop.permute.xlu0 %504
    %506 = vrot.lane.b32.xlu0 %v138, 8
    %v507 = vpop.permute.xlu0 %506
    %572 = vrot.lane.b32.xlu0 %v252, 12
    %v573 = vpop.permute.xlu0 %572
    %574 = vrot.lane.b32.xlu0 %v253, 12
    %v575 = vpop.permute.xlu0 %574
    %576 = vrot.lane.b32.xlu0 %v254, 12
    %v577 = vpop.permute.xlu0 %576
    %578 = vrot.lane.b32.xlu0 %v255, 12
    %v579 = vpop.permute.xlu0 %578
    %580 = vrot.lane.b32.xlu0 %v256, 12
    %v581 = vpop.permute.xlu0 %580
    %582 = vrot.lane.b32.xlu0 %v257, 12
    %v583 = vpop.permute.xlu0 %582
    %584 = vrot.lane.b32.xlu0 %v258, 12
    %v585 = vpop.permute.xlu0 %584
    %586 = vrot.lane.b32.xlu0 %v259, 12
    %v587 = vpop.permute.xlu0 %586
    %588 = vrot.lane.b32.xlu0 %v260, 12
    %v589 = vpop.permute.xlu0 %588
    %590 = vrot.lane.b32.xlu0 %v261, 12
    %v591 = vpop.permute.xlu0 %590
    %592 = vrot.lane.b32.xlu0 %v262, 12
    %v593 = vpop.permute.xlu0 %592
    %594 = vrot.lane.b32.xlu0 %v263, 12
    %v595 = vpop.permute.xlu0 %594
    %596 = vrot.lane.b32.xlu0 %v264, 12
    %v597 = vpop.permute.xlu0 %596
    %598 = vrot.lane.b32.xlu0 %v265, 12
    %v599 = vpop.permute.xlu0 %598
    %600 = vrot.lane.b32.xlu0 %v266, 12
    %v601 = vpop.permute.xlu0 %600
    %602 = vrot.lane.b32.xlu0 %v267, 12
    %v603 = vpop.permute.xlu0 %602
    %604 = vrot.lane.b32.xlu0 %v268, 12
    %v605 = vpop.permute.xlu0 %604
    %606 = vrot.lane.b32.xlu0 %v269, 12
    %v607 = vpop.permute.xlu0 %606
    %608 = vrot.lane.b32.xlu0 %v270, 12
    %v609 = vpop.permute.xlu0 %608
    %610 = vrot.lane.b32.xlu0 %v271, 12
    %v611 = vpop.permute.xlu0 %610
    %612 = vrot.lane.b32.xlu0 %v272, 12
    %v613 = vpop.permute.xlu0 %612
    %614 = vrot.lane.b32.xlu0 %v273, 12
    %v615 = vpop.permute.xlu0 %614
    %616 = vrot.lane.b32.xlu0 %v274, 12
    %v617 = vpop.permute.xlu0 %616
    %618 = vrot.lane.b32.xlu0 %v275, 12
    %v619 = vpop.permute.xlu0 %618
    %620 = vrot.lane.b32.xlu0 %v276, 12
    %v621 = vpop.permute.xlu0 %620
    %622 = vrot.lane.b32.xlu0 %v277, 12
    %v623 = vpop.permute.xlu0 %622
    %624 = vrot.lane.b32.xlu0 %v278, 12
    %v625 = vpop.permute.xlu0 %624
    %626 = vrot.lane.b32.xlu0 %v279, 12
    %v627 = vpop.permute.xlu0 %626
    %628 = vrot.lane.b32.xlu0 %v280, 12
    %v629 = vpop.permute.xlu0 %628
    %630 = vrot.lane.b32.xlu0 %v281, 12
    %v631 = vpop.permute.xlu0 %630
    %632 = vrot.lane.b32.xlu0 %v282, 12
    %v633 = vpop.permute.xlu0 %632
    %634 = vrot.lane.b32.xlu0 %v283, 12
    %v635 = vpop.permute.xlu0 %634
    %v668 = vsel %vm139, %v188, %v317
    %v669 = vsel %vm139, %v189, %v319
    %v670 = vsel %vm139, %v190, %v321
    %v671 = vsel %vm139, %v191, %v323
    %v672 = vsel %vm139, %v192, %v325
    %v673 = vsel %vm139, %v193, %v327
    %v674 = vsel %vm139, %v194, %v329
    %v675 = vsel %vm139, %v195, %v331
    %v676 = vsel %vm139, %v196, %v333
    %v677 = vsel %vm139, %v197, %v335
    %v678 = vsel %vm139, %v198, %v337
    %v679 = vsel %vm139, %v199, %v339
    %v680 = vsel %vm139, %v200, %v341
    %v681 = vsel %vm139, %v201, %v343
    %v682 = vsel %vm139, %v202, %v345
    %v683 = vsel %vm139, %v203, %v347
    %v684 = vsel %vm139, %v204, %v349
    %v685 = vsel %vm139, %v205, %v351
    %v686 = vsel %vm139, %v206, %v353
    %v687 = vsel %vm139, %v207, %v355
    %v688 = vsel %vm139, %v208, %v357
    %v689 = vsel %vm139, %v209, %v359
    %v690 = vsel %vm139, %v210, %v361
    %v691 = vsel %vm139, %v211, %v363
    %v692 = vsel %vm139, %v212, %v365
    %v693 = vsel %vm139, %v213, %v367
    %v694 = vsel %vm139, %v214, %v369
    %v695 = vsel %vm139, %v215, %v371
    %v696 = vsel %vm139, %v216, %v373
    %v697 = vsel %vm139, %v217, %v375
    %v698 = vsel %vm139, %v218, %v377
    %v699 = vsel %vm139, %v219, %v379
    %vm700 = vcmask 64512
    %v701 = vsel %vm700, %v668, %v445
    %v702 = vsel %vm700, %v669, %v447
    %v703 = vsel %vm700, %v670, %v449
    %v704 = vsel %vm700, %v671, %v451
    %v705 = vsel %vm700, %v672, %v453
    %v706 = vsel %vm700, %v673, %v455
    %v707 = vsel %vm700, %v674, %v457
    %v708 = vsel %vm700, %v675, %v459
    %v709 = vsel %vm700, %v676, %v461
    %v710 = vsel %vm700, %v677, %v463
    %v711 = vsel %vm700, %v678, %v465
    %v712 = vsel %vm700, %v679, %v467
    %v713 = vsel %vm700, %v680, %v469
    %v714 = vsel %vm700, %v681, %v471
    %v715 = vsel %vm700, %v682, %v473
    %v716 = vsel %vm700, %v683, %v475
    %v717 = vsel %vm700, %v684, %v477
    %v718 = vsel %vm700, %v685, %v479
    %v719 = vsel %vm700, %v686, %v481
    %v720 = vsel %vm700, %v687, %v483
    %v721 = vsel %vm700, %v688, %v485
    %v722 = vsel %vm700, %v689, %v487
    %v723 = vsel %vm700, %v690, %v489
    %v724 = vsel %vm700, %v691, %v491
    %v725 = vsel %vm700, %v692, %v493
    %v726 = vsel %vm700, %v693, %v495
    %v727 = vsel %vm700, %v694, %v497
    %v728 = vsel %vm700, %v695, %v499
    %v729 = vsel %vm700, %v696, %v501
    %v730 = vsel %vm700, %v697, %v503
    %v731 = vsel %vm700, %v698, %v505
    %v732 = vsel %vm700, %v699, %v507
    %vm733 = vcmask 97280
    %v734 = vsel %vm733, %v701, %v573
    %v735 = vsel %vm733, %v702, %v575
    %v736 = vsel %vm733, %v703, %v577
    %v737 = vsel %vm733, %v704, %v579
    %v738 = vsel %vm733, %v705, %v581
    %v739 = vsel %vm733, %v706, %v583
    %v740 = vsel %vm733, %v707, %v585
    %v741 = vsel %vm733, %v708, %v587
    %v742 = vsel %vm733, %v709, %v589
    %v743 = vsel %vm733, %v710, %v591
    %v744 = vsel %vm733, %v711, %v593
    %v745 = vsel %vm733, %v712, %v595
    %v746 = vsel %vm733, %v713, %v597
    %v747 = vsel %vm733, %v714, %v599
    %v748 = vsel %vm733, %v715, %v601
    %v749 = vsel %vm733, %v716, %v603
    %v750 = vsel %vm733, %v717, %v605
    %v751 = vsel %vm733, %v718, %v607
    %v752 = vsel %vm733, %v719, %v609
    %v753 = vsel %vm733, %v720, %v611
    %v754 = vsel %vm733, %v721, %v613
    %v755 = vsel %vm733, %v722, %v615
    %v756 = vsel %vm733, %v723, %v617
    %v757 = vsel %vm733, %v724, %v619
    %v758 = vsel %vm733, %v725, %v621
    %v759 = vsel %vm733, %v726, %v623
    %v760 = vsel %vm733, %v727, %v625
    %v761 = vsel %vm733, %v728, %v627
    %v762 = vsel %vm733, %v729, %v629
    %v763 = vsel %vm733, %v730, %v631
    %v764 = vsel %vm733, %v731, %v633
    %v765 = vsel %vm733, %v732, %v635
    %v766 = vld [vmem:[#allocation8] sm:$0xff]
    %v767 = vld [vmem:[#allocation8 + $0x8] sm:$0xff]
    %v768 = vld [vmem:[#allocation10] sm:$0x1]
    %v770 = vlaneseq
    %v771 = vshrl.u32 %v770, 7
    %v772 = vsub.s32 0, %v771
    %v773 = vrot.slane %v768, %v772
    %vm775 = vcmask 130048
    %v777 = vsel %vm775, %v734, 0
    %v780 = vsel %vm775, %v735, 0
    %v783 = vsel %vm775, %v736, 0
    %v786 = vsel %vm775, %v737, 0
    %v789 = vsel %vm775, %v738, 0
    %v792 = vsel %vm775, %v739, 0
    %v795 = vsel %vm775, %v740, 0
    %v798 = vsel %vm775, %v741, 0
    %v801 = vsel %vm775, %v742, 0
    %v804 = vsel %vm775, %v743, 0
    %v807 = vsel %vm775, %v744, 0
    %v810 = vsel %vm775, %v745, 0
    %v813 = vsel %vm775, %v746, 0
    %v816 = vsel %vm775, %v747, 0
    %v819 = vsel %vm775, %v748, 0
    %v822 = vsel %vm775, %v749, 0
    %v825 = vsel %vm775, %v750, 0
    %v828 = vsel %vm775, %v751, 0
    %v831 = vsel %vm775, %v752, 0
    %v834 = vsel %vm775, %v753, 0
    %v837 = vsel %vm775, %v754, 0
    %v840 = vsel %vm775, %v755, 0
    %v843 = vsel %vm775, %v756, 0
    %v846 = vsel %vm775, %v757, 0
    %v849 = vsel %vm775, %v758, 0
    %v852 = vsel %vm775, %v759, 0
    %v855 = vsel %vm775, %v760, 0
    %v858 = vsel %vm775, %v761, 0
    %v861 = vsel %vm775, %v762, 0
    %v864 = vsel %vm775, %v763, 0
    %v867 = vsel %vm775, %v764, 0
    %v870 = vsel %vm775, %v765, 0
    %872 = vmatprep.subr.mxu0 0.0
    %873 = vmatpush1.msra.mxu0 %v766
    %874 = vmatprep.subr.mxu0 0.0
    %875 = vmatpush1.msra.mxu0 %v767
    %876 = vmatprep.subr.mxu0 0.0
    %877 = vmatpush1.msra.mxu0 0.0
    %878 = vmatprep.subr.mxu0 0.0
    %879 = vmatpush1.msra.mxu0 0.0
    %880 = vmatprep.subr.mxu0 0.0
    %881 = vmatpush1.msra.mxu0 0.0
    %882 = vmatprep.subr.mxu0 0.0
    %883 = vmatpush1.msra.mxu0 0.0
    %884 = vmatprep.subr.mxu0 0.0
    %885 = vmatpush1.msra.mxu0 0.0
    %886 = vmatprep.subr.mxu0 0.0
    %887 = vmatpush1.msra.mxu0 0.0
    %888 = vmatprep.subr.mxu0 0.0
    %889 = vmatpush1.msra.mxu0 0.0
    %890 = vmatprep.subr.mxu0 0.0
    %891 = vmatpush1.msra.mxu0 0.0
    %892 = vmatprep.subr.mxu0 0.0
    %893 = vmatpush1.msra.mxu0 0.0
    %894 = vmatprep.subr.mxu0 0.0
    %895 = vmatpush1.msra.mxu0 0.0
    %896 = vmatprep.subr.mxu0 0.0
    %897 = vmatpush1.msra.mxu0 0.0
    %898 = vmatprep.subr.mxu0 0.0
    %899 = vmatpush1.msra.mxu0 0.0
    %900 = vmatprep.subr.mxu0 0.0
    %901 = vmatpush1.msra.mxu0 0.0
    %902 = vmatprep.subr.mxu0 0.0
    %903 = vmatpush1.msra.mxu0 0.0
    %904 = vmatprep.subr.mxu0 0.0
    %905 = vmatpush1.msra.mxu0 0.0
    %906 = vmatprep.subr.mxu0 0.0
    %907 = vmatpush1.msra.mxu0 0.0
    %908 = vmatprep.subr.mxu0 0.0
    %909 = vmatpush1.msra.mxu0 0.0
    %910 = vmatprep.subr.mxu0 0.0
    %911 = vmatpush1.msra.mxu0 0.0
    %912 = vmatprep.subr.mxu0 0.0
    %913 = vmatpush1.msra.mxu0 0.0
    %914 = vmatprep.subr.mxu0 0.0
    %915 = vmatpush1.msra.mxu0 0.0
    %916 = vmatprep.subr.mxu0 0.0
    %917 = vmatpush1.msra.mxu0 0.0
    %918 = vmatprep.subr.mxu0 0.0
    %919 = vmatpush1.msra.mxu0 0.0
    %920 = vmatprep.subr.mxu0 0.0
    %921 = vmatpush1.msra.mxu0 0.0
    %922 = vmatprep.subr.mxu0 0.0
    %923 = vmatpush1.msra.mxu0 0.0
    %924 = vmatprep.subr.mxu0 0.0
    %925 = vmatpush1.msra.mxu0 0.0
    %926 = vmatprep.subr.mxu0 0.0
    %927 = vmatpush1.msra.mxu0 0.0
    %928 = vmatprep.subr.mxu0 0.0
    %929 = vmatpush1.msra.mxu0 0.0
    %930 = vmatprep.subr.mxu0 0.0
    %931 = vmatpush1.msra.mxu0 0.0
    %932 = vmatprep.subr.mxu0 0.0
    %933 = vmatpush1.msra.mxu0 0.0
    %934 = vmatprep.subr.mxu0 0.0
    %935 = vmatpush1.msra.mxu0 0.0
    %936 = vmatprep.mubr.f32.mxu0 0.0
    %937 = vmatmul.mubr.f32.gmra.mrb[0].mxu0 %v777
    %v938 = vpop.f32.mrb[0].mxu0
    %v939 = vadd.f32 %v773, %v938
    %v940 = vpop.f32.mrb[0].mxu0
    %941 = vmatprep.mubr.f32.mxu0 0.0
    %942 = vmatmul.mubr.f32.gmra.mrb[0].mxu0 %v780
    %v943 = vpop.f32.mrb[0].mxu0
    %v944 = vadd.f32 %v773, %v943
    %v945 = vpop.f32.mrb[0].mxu0
    %946 = vmatprep.mubr.f32.mxu0 0.0
    %947 = vmatmul.mubr.f32.gmra.mrb[0].mxu0 %v783
    %v948 = vpop.f32.mrb[0].mxu0
    %v949 = vadd.f32 %v773, %v948
    %v950 = vpop.f32.mrb[0].mxu0
    %951 = vmatprep.mubr.f32.mxu0 0.0
    %952 = vmatmul.mubr.f32.gmra.mrb[0].mxu0 %v786
    %v953 = vpop.f32.mrb[0].mxu0
    %v954 = vadd.f32 %v773, %v953
    %v955 = vpop.f32.mrb[0].mxu0
    %956 = vmatprep.mubr.f32.mxu0 0.0
    %957 = vmatmul.mubr.f32.gmra.mrb[0].mxu0 %v789
    %v958 = vpop.f32.mrb[0].mxu0
    %v959 = vadd.f32 %v773, %v958
    %v960 = vpop.f32.mrb[0].mxu0
    %961 = vmatprep.mubr.f32.mxu0 0.0
    %962 = vmatmul.mubr.f32.gmra.mrb[0].mxu0 %v792
    %v963 = vpop.f32.mrb[0].mxu0
    %v964 = vadd.f32 %v773, %v963
    %v965 = vpop.f32.mrb[0].mxu0
    %966 = vmatprep.mubr.f32.mxu0 0.0
    %967 = vmatmul.mubr.f32.gmra.mrb[0].mxu0 %v795
    %v968 = vpop.f32.mrb[0].mxu0
    %v969 = vadd.f32 %v773, %v968
    %v970 = vpop.f32.mrb[0].mxu0
    %971 = vmatprep.mubr.f32.mxu0 0.0
    %972 = vmatmul.mubr.f32.gmra.mrb[0].mxu0 %v798
    %v973 = vpop.f32.mrb[0].mxu0
    %v974 = vadd.f32 %v773, %v973
    %v975 = vpop.f32.mrb[0].mxu0
    %976 = vmatprep.mubr.f32.mxu0 0.0
    %977 = vmatmul.mubr.f32.gmra.mrb[0].mxu0 %v801
    %v978 = vpop.f32.mrb[0].mxu0
    %v979 = vadd.f32 %v773, %v978
    %v980 = vpop.f32.mrb[0].mxu0
    %981 = vmatprep.mubr.f32.mxu0 0.0
    %982 = vmatmul.mubr.f32.gmra.mrb[0].mxu0 %v804
    %v983 = vpop.f32.mrb[0].mxu0
    %v984 = vadd.f32 %v773, %v983
    %v985 = vpop.f32.mrb[0].mxu0
    %986 = vmatprep.mubr.f32.mxu0 0.0
    %987 = vmatmul.mubr.f32.gmra.mrb[0].mxu0 %v807
    %v988 = vpop.f32.mrb[0].mxu0
    %v989 = vadd.f32 %v773, %v988
    %v990 = vpop.f32.mrb[0].mxu0
    %991 = vmatprep.mubr.f32.mxu0 0.0
    %992 = vmatmul.mubr.f32.gmra.mrb[0].mxu0 %v810
    %v993 = vpop.f32.mrb[0].mxu0
    %v994 = vadd.f32 %v773, %v993
    %v995 = vpop.f32.mrb[0].mxu0
    %996 = vmatprep.mubr.f32.mxu0 0.0
    %997 = vmatmul.mubr.f32.gmra.mrb[0].mxu0 %v813
    %v998 = vpop.f32.mrb[0].mxu0
    %v999 = vadd.f32 %v773, %v998
    %v1000 = vpop.f32.mrb[0].mxu0
    %1001 = vmatprep.mubr.f32.mxu0 0.0
    %1002 = vmatmul.mubr.f32.gmra.mrb[0].mxu0 %v816
    %v1003 = vpop.f32.mrb[0].mxu0
    %v1004 = vadd.f32 %v773, %v1003
    %v1005 = vpop.f32.mrb[0].mxu0
    %1006 = vmatprep.mubr.f32.mxu0 0.0
    %1007 = vmatmul.mubr.f32.gmra.mrb[0].mxu0 %v819
    %v1008 = vpop.f32.mrb[0].mxu0
    %v1009 = vadd.f32 %v773, %v1008
    %v1010 = vpop.f32.mrb[0].mxu0
    %1011 = vmatprep.mubr.f32.mxu0 0.0
    %1012 = vmatmul.mubr.f32.gmra.mrb[0].mxu0 %v822
    %v1013 = vpop.f32.mrb[0].mxu0
    %v1014 = vadd.f32 %v773, %v1013
    %v1015 = vpop.f32.mrb[0].mxu0
    %1016 = vmatprep.mubr.f32.mxu0 0.0
    %1017 = vmatmul.mubr.f32.gmra.mrb[0].mxu0 %v825
    %v1018 = vpop.f32.mrb[0].mxu0
    %v1019 = vadd.f32 %v773, %v1018
    %v1020 = vpop.f32.mrb[0].mxu0
    %1021 = vmatprep.mubr.f32.mxu0 0.0
    %1022 = vmatmul.mubr.f32.gmra.mrb[0].mxu0 %v828
    %v1023 = vpop.f32.mrb[0].mxu0
    %v1024 = vadd.f32 %v773, %v1023
    %v1025 = vpop.f32.mrb[0].mxu0
    %1026 = vmatprep.mubr.f32.mxu0 0.0
    %1027 = vmatmul.mubr.f32.gmra.mrb[0].mxu0 %v831
    %v1028 = vpop.f32.mrb[0].mxu0
    %v1029 = vadd.f32 %v773, %v1028
    %v1030 = vpop.f32.mrb[0].mxu0
    %1031 = vmatprep.mubr.f32.mxu0 0.0
    %1032 = vmatmul.mubr.f32.gmra.mrb[0].mxu0 %v834
    %v1033 = vpop.f32.mrb[0].mxu0
    %v1034 = vadd.f32 %v773, %v1033
    %v1035 = vpop.f32.mrb[0].mxu0
    %1036 = vmatprep.mubr.f32.mxu0 0.0
    %1037 = vmatmul.mubr.f32.gmra.mrb[0].mxu0 %v837
    %v1038 = vpop.f32.mrb[0].mxu0
    %v1039 = vadd.f32 %v773, %v1038
    %v1040 = vpop.f32.mrb[0].mxu0
    %1041 = vmatprep.mubr.f32.mxu0 0.0
    %1042 = vmatmul.mubr.f32.gmra.mrb[0].mxu0 %v840
    %v1043 = vpop.f32.mrb[0].mxu0
    %v1044 = vadd.f32 %v773, %v1043
    %v1045 = vpop.f32.mrb[0].mxu0
    %1046 = vmatprep.mubr.f32.mxu0 0.0
    %1047 = vmatmul.mubr.f32.gmra.mrb[0].mxu0 %v843
    %v1048 = vpop.f32.mrb[0].mxu0
    %v1049 = vadd.f32 %v773, %v1048
    %v1050 = vpop.f32.mrb[0].mxu0
    %1051 = vmatprep.mubr.f32.mxu0 0.0
    %1052 = vmatmul.mubr.f32.gmra.mrb[0].mxu0 %v846
    %v1053 = vpop.f32.mrb[0].mxu0
    %v1054 = vadd.f32 %v773, %v1053
    %v1055 = vpop.f32.mrb[0].mxu0
    %1056 = vmatprep.mubr.f32.mxu0 0.0
    %1057 = vmatmul.mubr.f32.gmra.mrb[0].mxu0 %v849
    %v1058 = vpop.f32.mrb[0].mxu0
    %v1059 = vadd.f32 %v773, %v1058
    %v1060 = vpop.f32.mrb[0].mxu0
    %1061 = vmatprep.mubr.f32.mxu0 0.0
    %1062 = vmatmul.mubr.f32.gmra.mrb[0].mxu0 %v852
    %v1063 = vpop.f32.mrb[0].mxu0
    %v1064 = vadd.f32 %v773, %v1063
    %v1065 = vpop.f32.mrb[0].mxu0
    %1066 = vmatprep.mubr.f32.mxu0 0.0
    %1067 = vmatmul.mubr.f32.gmra.mrb[0].mxu0 %v855
    %v1068 = vpop.f32.mrb[0].mxu0
    %v1069 = vadd.f32 %v773, %v1068
    %v1070 = vpop.f32.mrb[0].mxu0
    %1071 = vmatprep.mubr.f32.mxu0 0.0
    %1072 = vmatmul.mubr.f32.gmra.mrb[0].mxu0 %v858
    %v1073 = vpop.f32.mrb[0].mxu0
    %v1074 = vadd.f32 %v773, %v1073
    %v1075 = vpop.f32.mrb[0].mxu0
    %1076 = vmatprep.mubr.f32.mxu0 0.0
    %1077 = vmatmul.mubr.f32.gmra.mrb[0].mxu0 %v861
    %v1078 = vpop.f32.mrb[0].mxu0
    %v1079 = vadd.f32 %v773, %v1078
    %v1080 = vpop.f32.mrb[0].mxu0
    %1081 = vmatprep.mubr.f32.mxu0 0.0
    %1082 = vmatmul.mubr.f32.gmra.mrb[0].mxu0 %v864
    %v1083 = vpop.f32.mrb[0].mxu0
    %v1084 = vadd.f32 %v773, %v1083
    %v1085 = vpop.f32.mrb[0].mxu0
    %1086 = vmatprep.mubr.f32.mxu0 0.0
    %1087 = vmatmul.mubr.f32.gmra.mrb[0].mxu0 %v867
    %v1088 = vpop.f32.mrb[0].mxu0
    %v1089 = vadd.f32 %v773, %v1088
    %v1090 = vpop.f32.mrb[0].mxu0
    %1091 = vmatprep.mubr.f32.mxu0 0.0
    %1092 = vmatmul.mubr.f32.gmra.mrb[0].mxu0 %v870
    %v1093 = vpop.f32.mrb[0].mxu0
    %v1094 = vadd.f32 %v773, %v1093
    %v1095 = vpop.f32.mrb[0].mxu0
    %1096 = vdwg.mxu0
    %v1097 = vmax.f32 %v939, 0.0
    %v1098 = vmax.f32 %v944, 0.0
    %v1099 = vmax.f32 %v949, 0.0
    %v1100 = vmax.f32 %v954, 0.0
    %v1101 = vmax.f32 %v959, 0.0
    %v1102 = vmax.f32 %v964, 0.0
    %v1103 = vmax.f32 %v969, 0.0
    %v1104 = vmax.f32 %v974, 0.0
    %v1105 = vmax.f32 %v979, 0.0
    %v1106 = vmax.f32 %v984, 0.0
    %v1107 = vmax.f32 %v989, 0.0
    %v1108 = vmax.f32 %v994, 0.0
    %v1109 = vmax.f32 %v999, 0.0
    %v1110 = vmax.f32 %v1004, 0.0
    %v1111 = vmax.f32 %v1009, 0.0
    %v1112 = vmax.f32 %v1014, 0.0
    %v1113 = vmax.f32 %v1019, 0.0
    %v1114 = vmax.f32 %v1024, 0.0
    %v1115 = vmax.f32 %v1029, 0.0
    %v1116 = vmax.f32 %v1034, 0.0
    %v1117 = vmax.f32 %v1039, 0.0
    %v1118 = vmax.f32 %v1044, 0.0
    %v1119 = vmax.f32 %v1049, 0.0
    %v1120 = vmax.f32 %v1054, 0.0
    %v1121 = vmax.f32 %v1059, 0.0
    %v1122 = vmax.f32 %v1064, 0.0
    %v1123 = vmax.f32 %v1069, 0.0
    %v1124 = vmax.f32 %v1074, 0.0
    %v1125 = vmax.f32 %v1079, 0.0
    %v1126 = vmax.f32 %v1084, 0.0
    %v1127 = vmax.f32 %v1089, 0.0
    %v1128 = vmax.f32 %v1094, 0.0
    %v1129 = vlaneseq
    %v1130 = vshrl.u32 %v1129, 7
    %v1131 = vadd.s32 %v1130, 8
    %v1132 = vadd.s32 %v1130, 16
    %v1133 = vadd.s32 %v1130, 24
    %v1134 = vlaneseq
    %v1135 = vand.u32 %v1134, 127
    %vm1136 = vcmp.eq.s32.totalorder %v1130, 0
    %vm1137 = vcmp.eq.s32.totalorder %v1131, 0
    %vm1138 = vcmp.eq.s32.totalorder %v1132, 0
    %vm1139 = vcmp.eq.s32.totalorder %v1133, 0
    %vm1140 = vcmp.lt.s32.totalorder %v1135, 32
    %vm1141 = vmand %vm1136, %vm1140
    %vm1142 = vmand %vm1137, %vm1140
    %vm1143 = vmand %vm1138, %vm1140
    %vm1144 = vmand %vm1139, %vm1140
    %vm1145 = vcmp.eq.s32.totalorder %v1130, 31
    %vm1146 = vcmp.eq.s32.totalorder %v1131, 31
    %vm1147 = vcmp.eq.s32.totalorder %v1132, 31
    %vm1148 = vcmp.eq.s32.totalorder %v1133, 31
    %vm1149 = vcmp.ge.s32.totalorder %v1135, 64
    %vm1150 = vmand %vm1145, %vm1149
    %vm1151 = vmand %vm1146, %vm1149
    %vm1152 = vmand %vm1147, %vm1149
    %vm1153 = vmand %vm1148, %vm1149
    %vm1154 = vmor %vm1141, %vm1150
    %vm1155 = vmor %vm1142, %vm1151
    %vm1156 = vmor %vm1143, %vm1152
    %vm1157 = vmor %vm1144, %vm1153
    %v1158 = vsel %vm1154, 0.0, %v1097
    %v1159 = vsel %vm1155, 0.0, %v1098
    %v1160 = vsel %vm1156, 0.0, %v1099
    %v1161 = vsel %vm1157, 0.0, %v1100
    %v1162 = vsel %vm1154, 0.0, %v1101
    %v1163 = vsel %vm1155, 0.0, %v1102
    %v1164 = vsel %vm1156, 0.0, %v1103
    %v1165 = vsel %vm1157, 0.0, %v1104
    %v1166 = vsel %vm1154, 0.0, %v1105
    %v1167 = vsel %vm1155, 0.0, %v1106
    %v1168 = vsel %vm1156, 0.0, %v1107
    %v1169 = vsel %vm1157, 0.0, %v1108
    %v1170 = vsel %vm1154, 0.0, %v1109
    %v1171 = vsel %vm1155, 0.0, %v1110
    %v1172 = vsel %vm1156, 0.0, %v1111
    %v1173 = vsel %vm1157, 0.0, %v1112
    %v1174 = vsel %vm1154, 0.0, %v1113
    %v1175 = vsel %vm1155, 0.0, %v1114
    %v1176 = vsel %vm1156, 0.0, %v1115
    %v1177 = vsel %vm1157, 0.0, %v1116
    %v1178 = vsel %vm1154, 0.0, %v1117
    %v1179 = vsel %vm1155, 0.0, %v1118
    %v1180 = vsel %vm1156, 0.0, %v1119
    %v1181 = vsel %vm1157, 0.0, %v1120
    %v1182 = vsel %vm1154, 0.0, %v1121
    %v1183 = vsel %vm1155, 0.0, %v1122
    %v1184 = vsel %vm1156, 0.0, %v1123
    %v1185 = vsel %vm1157, 0.0, %v1124
    %v1186 = vsel %vm1154, 0.0, %v1125
    %v1187 = vsel %vm1155, 0.0, %v1126
    %v1188 = vsel %vm1156, 0.0, %v1127
    %v1189 = vsel %vm1157, 0.0, %v1128
    %v1190 = vld [vmem:[#allocation11] sm:$0xff]
    %v1191 = vld [vmem:[#allocation11 + $0x8] sm:$0xff]
    %v1192 = vld [vmem:[#allocation11 + $0x10] sm:$0xff]
    %v1193 = vld [vmem:[#allocation11 + $0x18] sm:$0xff]
    %v1194 = vld [vmem:[#allocation11 + $0x20] sm:$0xff]
    %v1195 = vld [vmem:[#allocation11 + $0x28] sm:$0xff]
    %v1196 = vld [vmem:[#allocation11 + $0x30] sm:$0xff]
    %v1197 = vld [vmem:[#allocation11 + $0x38] sm:$0xff]
    %v1198 = vld [vmem:[#allocation11 + $0x40] sm:$0xff]
    %v1199 = vld [vmem:[#allocation11 + $0x48] sm:$0xff]
    %v1200 = vld [vmem:[#allocation13] sm:$0x1]
    %v1202 = vlaneseq
    %v1203 = vshrl.u32 %v1202, 7
    %v1204 = vsub.s32 0, %v1203
    %v1205 = vrot.slane %v1200, %v1204
    %vm1207 = vcmask 654336
    %v1209 = vsel %vm1207, %v1158, 0
    %v1212 = vsel %vm1207, %v1159, 0
    %v1215 = vsel %vm1207, %v1160, 0
    %v1218 = vsel %vm1207, %v1161, 0
    %v1221 = vsel %vm1207, %v1162, 0
    %v1224 = vsel %vm1207, %v1163, 0
    %v1227 = vsel %vm1207, %v1164, 0
    %v1230 = vsel %vm1207, %v1165, 0
    %v1233 = vsel %vm1207, %v1166, 0
    %v1236 = vsel %vm1207, %v1167, 0
    %v1239 = vsel %vm1207, %v1168, 0
    %v1242 = vsel %vm1207, %v1169, 0
    %v1245 = vsel %vm1207, %v1170, 0
    %v1248 = vsel %vm1207, %v1171, 0
    %v1251 = vsel %vm1207, %v1172, 0
    %v1254 = vsel %vm1207, %v1173, 0
    %v1257 = vsel %vm1207, %v1174, 0
    %v1260 = vsel %vm1207, %v1175, 0
    %v1263 = vsel %vm1207, %v1176, 0
    %v1266 = vsel %vm1207, %v1177, 0
    %v1269 = vsel %vm1207, %v1178, 0
    %v1272 = vsel %vm1207, %v1179, 0
    %v1275 = vsel %vm1207, %v1180, 0
    %v1278 = vsel %vm1207, %v1181, 0
    %v1281 = vsel %vm1207, %v1182, 0
    %v1284 = vsel %vm1207, %v1183, 0
    %v1287 = vsel %vm1207, %v1184, 0
    %v1290 = vsel %vm1207, %v1185, 0
    %v1293 = vsel %vm1207, %v1186, 0
    %v1296 = vsel %vm1207, %v1187, 0
    %v1299 = vsel %vm1207, %v1188, 0
    %v1302 = vsel %vm1207, %v1189, 0
    %1304 = vmatprep.subr.mxu0 0.0
    %1305 = vmatpush1.msra.mxu0 %v1190
    %1306 = vmatprep.subr.mxu0 0.0
    %1307 = vmatpush1.msra.mxu0 %v1191
    %1308 = vmatprep.subr.mxu0 0.0
    %1309 = vmatpush1.msra.mxu0 %v1192
    %1310 = vmatprep.subr.mxu0 0.0
    %1311 = vmatpush1.msra.mxu0 %v1193
    %1312 = vmatprep.subr.mxu0 0.0
    %1313 = vmatpush1.msra.mxu0 %v1194
    %1314 = vmatprep.subr.mxu0 0.0
    %1315 = vmatpush1.msra.mxu0 %v1195
    %1316 = vmatprep.subr.mxu0 0.0
    %1317 = vmatpush1.msra.mxu0 %v1196
    %1318 = vmatprep.subr.mxu0 0.0
    %1319 = vmatpush1.msra.mxu0 %v1197
    %1320 = vmatprep.subr.mxu0 0.0
    %1321 = vmatpush1.msra.mxu0 %v1198
    %1322 = vmatprep.subr.mxu0 0.0
    %1323 = vmatpush1.msra.mxu0 %v1199
    %1324 = vmatprep.subr.mxu0 0.0
    %1325 = vmatpush1.msra.mxu0 0.0
    %1326 = vmatprep.subr.mxu0 0.0
    %1327 = vmatpush1.msra.mxu0 0.0
    %1328 = vmatprep.subr.mxu0 0.0
    %1329 = vmatpush1.msra.mxu0 0.0
    %1330 = vmatprep.subr.mxu0 0.0
    %1331 = vmatpush1.msra.mxu0 0.0
    %1332 = vmatprep.subr.mxu0 0.0
    %1333 = vmatpush1.msra.mxu0 0.0
    %1334 = vmatprep.subr.mxu0 0.0
    %1335 = vmatpush1.msra.mxu0 0.0
    %1336 = vmatprep.subr.mxu0 0.0
    %1337 = vmatpush1.msra.mxu0 0.0
    %1338 = vmatprep.subr.mxu0 0.0
    %1339 = vmatpush1.msra.mxu0 0.0
    %1340 = vmatprep.subr.mxu0 0.0
    %1341 = vmatpush1.msra.mxu0 0.0
    %1342 = vmatprep.subr.mxu0 0.0
    %1343 = vmatpush1.msra.mxu0 0.0
    %1344 = vmatprep.subr.mxu0 0.0
    %1345 = vmatpush1.msra.mxu0 0.0
    %1346 = vmatprep.subr.mxu0 0.0
    %1347 = vmatpush1.msra.mxu0 0.0
    %1348 = vmatprep.subr.mxu0 0.0
    %1349 = vmatpush1.msra.mxu0 0.0
    %1350 = vmatprep.subr.mxu0 0.0
    %1351 = vmatpush1.msra.mxu0 0.0
    %1352 = vmatprep.subr.mxu0 0.0
    %1353 = vmatpush1.msra.mxu0 0.0
    %1354 = vmatprep.subr.mxu0 0.0
    %1355 = vmatpush1.msra.mxu0 0.0
    %1356 = vmatprep.subr.mxu0 0.0
    %1357 = vmatpush1.msra.mxu0 0.0
    %1358 = vmatprep.subr.mxu0 0.0
    %1359 = vmatpush1.msra.mxu0 0.0
    %1360 = vmatprep.subr.mxu0 0.0
    %1361 = vmatpush1.msra.mxu0 0.0
    %1362 = vmatprep.subr.mxu0 0.0
    %1363 = vmatpush1.msra.mxu0 0.0
    %1364 = vmatprep.subr.mxu0 0.0
    %1365 = vmatpush1.msra.mxu0 0.0
    %1366 = vmatprep.subr.mxu0 0.0
    %1367 = vmatpush1.msra.mxu0 0.0
    %1368 = vmatprep.mubr.f32.mxu0 0.0
    %1369 = vmatmul.mubr.f32.gmra.mrb[0].mxu0 %v1209
    %v1370 = vpop.f32.mrb[0].mxu0
    %v1371 = vadd.f32 %v1205, %v1370
    %v1372 = vpop.f32.mrb[0].mxu0
    %1373 = vmatprep.mubr.f32.mxu0 0.0
    %1374 = vmatmul.mubr.f32.gmra.mrb[0].mxu0 %v1212
    %v1375 = vpop.f32.mrb[0].mxu0
    %v1376 = vadd.f32 %v1205, %v1375
    %v1377 = vpop.f32.mrb[0].mxu0
    %1378 = vmatprep.mubr.f32.mxu0 0.0
    %1379 = vmatmul.mubr.f32.gmra.mrb[0].mxu0 %v1215
    %v1380 = vpop.f32.mrb[0].mxu0
    %v1381 = vadd.f32 %v1205, %v1380
    %v1382 = vpop.f32.mrb[0].mxu0
    %1383 = vmatprep.mubr.f32.mxu0 0.0
    %1384 = vmatmul.mubr.f32.gmra.mrb[0].mxu0 %v1218
    %v1385 = vpop.f32.mrb[0].mxu0
    %v1386 = vadd.f32 %v1205, %v1385
    %v1387 = vpop.f32.mrb[0].mxu0
    %1388 = vmatprep.mubr.f32.mxu0 0.0
    %1389 = vmatmul.mubr.f32.gmra.mrb[0].mxu0 %v1221
    %v1390 = vpop.f32.mrb[0].mxu0
    %v1391 = vadd.f32 %v1205, %v1390
    %v1392 = vpop.f32.mrb[0].mxu0
    %1393 = vmatprep.mubr.f32.mxu0 0.0
    %1394 = vmatmul.mubr.f32.gmra.mrb[0].mxu0 %v1224
    %v1395 = vpop.f32.mrb[0].mxu0
    %v1396 = vadd.f32 %v1205, %v1395
    %v1397 = vpop.f32.mrb[0].mxu0
    %1398 = vmatprep.mubr.f32.mxu0 0.0
    %1399 = vmatmul.mubr.f32.gmra.mrb[0].mxu0 %v1227
    %v1400 = vpop.f32.mrb[0].mxu0
    %v1401 = vadd.f32 %v1205, %v1400
    %v1402 = vpop.f32.mrb[0].mxu0
    %1403 = vmatprep.mubr.f32.mxu0 0.0
    %1404 = vmatmul.mubr.f32.gmra.mrb[0].mxu0 %v1230
    %v1405 = vpop.f32.mrb[0].mxu0
    %v1406 = vadd.f32 %v1205, %v1405
    %v1407 = vpop.f32.mrb[0].mxu0
    %1408 = vmatprep.mubr.f32.mxu0 0.0
    %1409 = vmatmul.mubr.f32.gmra.mrb[0].mxu0 %v1233
    %v1410 = vpop.f32.mrb[0].mxu0
    %v1411 = vadd.f32 %v1205, %v1410
    %v1412 = vpop.f32.mrb[0].mxu0
    %1413 = vmatprep.mubr.f32.mxu0 0.0
    %1414 = vmatmul.mubr.f32.gmra.mrb[0].mxu0 %v1236
    %v1415 = vpop.f32.mrb[0].mxu0
    %v1416 = vadd.f32 %v1205, %v1415
    %v1417 = vpop.f32.mrb[0].mxu0
    %1418 = vmatprep.mubr.f32.mxu0 0.0
    %1419 = vmatmul.mubr.f32.gmra.mrb[0].mxu0 %v1239
    %v1420 = vpop.f32.mrb[0].mxu0
    %v1421 = vadd.f32 %v1205, %v1420
    %v1422 = vpop.f32.mrb[0].mxu0
    %1423 = vmatprep.mubr.f32.mxu0 0.0
    %1424 = vmatmul.mubr.f32.gmra.mrb[0].mxu0 %v1242
    %v1425 = vpop.f32.mrb[0].mxu0
    %v1426 = vadd.f32 %v1205, %v1425
    %v1427 = vpop.f32.mrb[0].mxu0
    %1428 = vmatprep.mubr.f32.mxu0 0.0
    %1429 = vmatmul.mubr.f32.gmra.mrb[0].mxu0 %v1245
    %v1430 = vpop.f32.mrb[0].mxu0
    %v1431 = vadd.f32 %v1205, %v1430
    %v1432 = vpop.f32.mrb[0].mxu0
    %1433 = vmatprep.mubr.f32.mxu0 0.0
    %1434 = vmatmul.mubr.f32.gmra.mrb[0].mxu0 %v1248
    %v1435 = vpop.f32.mrb[0].mxu0
    %v1436 = vadd.f32 %v1205, %v1435
    %v1437 = vpop.f32.mrb[0].mxu0
    %1438 = vmatprep.mubr.f32.mxu0 0.0
    %1439 = vmatmul.mubr.f32.gmra.mrb[0].mxu0 %v1251
    %v1440 = vpop.f32.mrb[0].mxu0
    %v1441 = vadd.f32 %v1205, %v1440
    %v1442 = vpop.f32.mrb[0].mxu0
    %1443 = vmatprep.mubr.f32.mxu0 0.0
    %1444 = vmatmul.mubr.f32.gmra.mrb[0].mxu0 %v1254
    %v1445 = vpop.f32.mrb[0].mxu0
    %v1446 = vadd.f32 %v1205, %v1445
    %v1447 = vpop.f32.mrb[0].mxu0
    %1448 = vmatprep.mubr.f32.mxu0 0.0
    %1449 = vmatmul.mubr.f32.gmra.mrb[0].mxu0 %v1257
    %v1450 = vpop.f32.mrb[0].mxu0
    %v1451 = vadd.f32 %v1205, %v1450
    %v1452 = vpop.f32.mrb[0].mxu0
    %1453 = vmatprep.mubr.f32.mxu0 0.0
    %1454 = vmatmul.mubr.f32.gmra.mrb[0].mxu0 %v1260
    %v1455 = vpop.f32.mrb[0].mxu0
    %v1456 = vadd.f32 %v1205, %v1455
    %v1457 = vpop.f32.mrb[0].mxu0
    %1458 = vmatprep.mubr.f32.mxu0 0.0
    %1459 = vmatmul.mubr.f32.gmra.mrb[0].mxu0 %v1263
    %v1460 = vpop.f32.mrb[0].mxu0
    %v1461 = vadd.f32 %v1205, %v1460
    %v1462 = vpop.f32.mrb[0].mxu0
    %1463 = vmatprep.mubr.f32.mxu0 0.0
    %1464 = vmatmul.mubr.f32.gmra.mrb[0].mxu0 %v1266
    %v1465 = vpop.f32.mrb[0].mxu0
    %v1466 = vadd.f32 %v1205, %v1465
    %v1467 = vpop.f32.mrb[0].mxu0
    %1468 = vmatprep.mubr.f32.mxu0 0.0
    %1469 = vmatmul.mubr.f32.gmra.mrb[0].mxu0 %v1269
    %v1470 = vpop.f32.mrb[0].mxu0
    %v1471 = vadd.f32 %v1205, %v1470
    %v1472 = vpop.f32.mrb[0].mxu0
    %1473 = vmatprep.mubr.f32.mxu0 0.0
    %1474 = vmatmul.mubr.f32.gmra.mrb[0].mxu0 %v1272
    %v1475 = vpop.f32.mrb[0].mxu0
    %v1476 = vadd.f32 %v1205, %v1475
    %v1477 = vpop.f32.mrb[0].mxu0
    %1478 = vmatprep.mubr.f32.mxu0 0.0
    %1479 = vmatmul.mubr.f32.gmra.mrb[0].mxu0 %v1275
    %v1480 = vpop.f32.mrb[0].mxu0
    %v1481 = vadd.f32 %v1205, %v1480
    %v1482 = vpop.f32.mrb[0].mxu0
    %1483 = vmatprep.mubr.f32.mxu0 0.0
    %1484 = vmatmul.mubr.f32.gmra.mrb[0].mxu0 %v1278
    %v1485 = vpop.f32.mrb[0].mxu0
    %v1486 = vadd.f32 %v1205, %v1485
    %v1487 = vpop.f32.mrb[0].mxu0
    %1488 = vmatprep.mubr.f32.mxu0 0.0
    %1489 = vmatmul.mubr.f32.gmra.mrb[0].mxu0 %v1281
    %v1490 = vpop.f32.mrb[0].mxu0
    %v1491 = vadd.f32 %v1205, %v1490
    %v1492 = vpop.f32.mrb[0].mxu0
    %1493 = vmatprep.mubr.f32.mxu0 0.0
    %1494 = vmatmul.mubr.f32.gmra.mrb[0].mxu0 %v1284
    %v1495 = vpop.f32.mrb[0].mxu0
    %v1496 = vadd.f32 %v1205, %v1495
    %v1497 = vpop.f32.mrb[0].mxu0
    %1498 = vmatprep.mubr.f32.mxu0 0.0
    %1499 = vmatmul.mubr.f32.gmra.mrb[0].mxu0 %v1287
    %v1500 = vpop.f32.mrb[0].mxu0
    %v1501 = vadd.f32 %v1205, %v1500
    %v1502 = vpop.f32.mrb[0].mxu0
    %1503 = vmatprep.mubr.f32.mxu0 0.0
    %1504 = vmatmul.mubr.f32.gmra.mrb[0].mxu0 %v1290
    %v1505 = vpop.f32.mrb[0].mxu0
    %v1506 = vadd.f32 %v1205, %v1505
    %v1507 = vpop.f32.mrb[0].mxu0
    %1508 = vmatprep.mubr.f32.mxu0 0.0
    %1509 = vmatmul.mubr.f32.gmra.mrb[0].mxu0 %v1293
    %v1510 = vpop.f32.mrb[0].mxu0
    %v1511 = vadd.f32 %v1205, %v1510
    %v1512 = vpop.f32.mrb[0].mxu0
    %1513 = vmatprep.mubr.f32.mxu0 0.0
    %1514 = vmatmul.mubr.f32.gmra.mrb[0].mxu0 %v1296
    %v1515 = vpop.f32.mrb[0].mxu0
    %v1516 = vadd.f32 %v1205, %v1515
    %v1517 = vpop.f32.mrb[0].mxu0
    %1518 = vmatprep.mubr.f32.mxu0 0.0
    %1519 = vmatmul.mubr.f32.gmra.mrb[0].mxu0 %v1299
    %v1520 = vpop.f32.mrb[0].mxu0
    %v1521 = vadd.f32 %v1205, %v1520
    %v1522 = vpop.f32.mrb[0].mxu0
    %1523 = vmatprep.mubr.f32.mxu0 0.0
    %1524 = vmatmul.mubr.f32.gmra.mrb[0].mxu0 %v1302
    %v1525 = vpop.f32.mrb[0].mxu0
    %v1526 = vadd.f32 %v1205, %v1525
    %v1527 = vpop.f32.mrb[0].mxu0
    %1528 = vdwg.mxu0
    %v1529 = vmax.f32 %v1371, 0.0
    %v1530 = vmax.f32 %v1376, 0.0
    %v1531 = vmax.f32 %v1381, 0.0
    %v1532 = vmax.f32 %v1386, 0.0
    %v1533 = vmax.f32 %v1391, 0.0
    %v1534 = vmax.f32 %v1396, 0.0
    %v1535 = vmax.f32 %v1401, 0.0
    %v1536 = vmax.f32 %v1406, 0.0
    %v1537 = vmax.f32 %v1411, 0.0
    %v1538 = vmax.f32 %v1416, 0.0
    %v1539 = vmax.f32 %v1421, 0.0
    %v1540 = vmax.f32 %v1426, 0.0
    %v1541 = vmax.f32 %v1431, 0.0
    %v1542 = vmax.f32 %v1436, 0.0
    %v1543 = vmax.f32 %v1441, 0.0
    %v1544 = vmax.f32 %v1446, 0.0
    %v1545 = vmax.f32 %v1451, 0.0
    %v1546 = vmax.f32 %v1456, 0.0
    %v1547 = vmax.f32 %v1461, 0.0
    %v1548 = vmax.f32 %v1466, 0.0
    %v1549 = vmax.f32 %v1471, 0.0
    %v1550 = vmax.f32 %v1476, 0.0
    %v1551 = vmax.f32 %v1481, 0.0
    %v1552 = vmax.f32 %v1486, 0.0
    %v1553 = vmax.f32 %v1491, 0.0
    %v1554 = vmax.f32 %v1496, 0.0
    %v1555 = vmax.f32 %v1501, 0.0
    %v1556 = vmax.f32 %v1506, 0.0
    %v1557 = vmax.f32 %v1511, 0.0
    %v1558 = vmax.f32 %v1516, 0.0
    %v1559 = vmax.f32 %v1521, 0.0
    %v1560 = vmax.f32 %v1526, 0.0
    %v1561 = vld [vmem:[#allocation14] sm:$0xff]
    %v1562 = vld [vmem:[#allocation14 + $0x8] sm:$0xff]
    %v1564 = vsel %vm775, %v1529, 0
    %v1567 = vsel %vm775, %v1530, 0
    %v1570 = vsel %vm775, %v1531, 0
    %v1573 = vsel %vm775, %v1532, 0
    %v1576 = vsel %vm775, %v1533, 0
    %v1579 = vsel %vm775, %v1534, 0
    %v1582 = vsel %vm775, %v1535, 0
    %v1585 = vsel %vm775, %v1536, 0
    %v1588 = vsel %vm775, %v1537, 0
    %v1591 = vsel %vm775, %v1538, 0
    %v1594 = vsel %vm775, %v1539, 0
    %v1597 = vsel %vm775, %v1540, 0
    %v1600 = vsel %vm775, %v1541, 0
    %v1603 = vsel %vm775, %v1542, 0
    %v1606 = vsel %vm775, %v1543, 0
    %v1609 = vsel %vm775, %v1544, 0
    %v1612 = vsel %vm775, %v1545, 0
    %v1615 = vsel %vm775, %v1546, 0
    %v1618 = vsel %vm775, %v1547, 0
    %v1621 = vsel %vm775, %v1548, 0
    %v1624 = vsel %vm775, %v1549, 0
    %v1627 = vsel %vm775, %v1550, 0
    %v1630 = vsel %vm775, %v1551, 0
    %v1633 = vsel %vm775, %v1552, 0
    %v1636 = vsel %vm775, %v1553, 0
    %v1639 = vsel %vm775, %v1554, 0
    %v1642 = vsel %vm775, %v1555, 0
    %v1645 = vsel %vm775, %v1556, 0
    %v1648 = vsel %vm775, %v1557, 0
    %v1651 = vsel %vm775, %v1558, 0
    %v1654 = vsel %vm775, %v1559, 0
    %v1657 = vsel %vm775, %v1560, 0
    %1659 = vmatprep.subr.mxu0 0.0
    %1660 = vmatpush1.msra.mxu0 %v1561
    %1661 = vmatprep.subr.mxu0 0.0
    %1662 = vmatpush1.msra.mxu0 %v1562
    %1663 = vmatprep.subr.mxu0 0.0
    %1664 = vmatpush1.msra.mxu0 0.0
    %1665 = vmatprep.subr.mxu0 0.0
    %1666 = vmatpush1.msra.mxu0 0.0
    %1667 = vmatprep.subr.mxu0 0.0
    %1668 = vmatpush1.msra.mxu0 0.0
    %1669 = vmatprep.subr.mxu0 0.0
    %1670 = vmatpush1.msra.mxu0 0.0
    %1671 = vmatprep.subr.mxu0 0.0
    %1672 = vmatpush1.msra.mxu0 0.0
    %1673 = vmatprep.subr.mxu0 0.0
    %1674 = vmatpush1.msra.mxu0 0.0
    %1675 = vmatprep.subr.mxu0 0.0
    %1676 = vmatpush1.msra.mxu0 0.0
    %1677 = vmatprep.subr.mxu0 0.0
    %1678 = vmatpush1.msra.mxu0 0.0
    %1679 = vmatprep.subr.mxu0 0.0
    %1680 = vmatpush1.msra.mxu0 0.0
    %1681 = vmatprep.subr.mxu0 0.0
    %1682 = vmatpush1.msra.mxu0 0.0
    %1683 = vmatprep.subr.mxu0 0.0
    %1684 = vmatpush1.msra.mxu0 0.0
    %1685 = vmatprep.subr.mxu0 0.0
    %1686 = vmatpush1.msra.mxu0 0.0
    %1687 = vmatprep.subr.mxu0 0.0
    %1688 = vmatpush1.msra.mxu0 0.0
    %1689 = vmatprep.subr.mxu0 0.0
    %1690 = vmatpush1.msra.mxu0 0.0
    %1691 = vmatprep.subr.mxu0 0.0
    %1692 = vmatpush1.msra.mxu0 0.0
    %1693 = vmatprep.subr.mxu0 0.0
    %1694 = vmatpush1.msra.mxu0 0.0
    %1695 = vmatprep.subr.mxu0 0.0
    %1696 = vmatpush1.msra.mxu0 0.0
    %1697 = vmatprep.subr.mxu0 0.0
    %1698 = vmatpush1.msra.mxu0 0.0
    %1699 = vmatprep.subr.mxu0 0.0
    %1700 = vmatpush1.msra.mxu0 0.0
    %1701 = vmatprep.subr.mxu0 0.0
    %1702 = vmatpush1.msra.mxu0 0.0
    %1703 = vmatprep.subr.mxu0 0.0
    %1704 = vmatpush1.msra.mxu0 0.0
    %1705 = vmatprep.subr.mxu0 0.0
    %1706 = vmatpush1.msra.mxu0 0.0
    %1707 = vmatprep.subr.mxu0 0.0
    %1708 = vmatpush1.msra.mxu0 0.0
    %1709 = vmatprep.subr.mxu0 0.0
    %1710 = vmatpush1.msra.mxu0 0.0
    %1711 = vmatprep.subr.mxu0 0.0
    %1712 = vmatpush1.msra.mxu0 0.0
    %1713 = vmatprep.subr.mxu0 0.0
    %1714 = vmatpush1.msra.mxu0 0.0
    %1715 = vmatprep.subr.mxu0 0.0
    %1716 = vmatpush1.msra.mxu0 0.0
    %1717 = vmatprep.subr.mxu0 0.0
    %1718 = vmatpush1.msra.mxu0 0.0
    %1719 = vmatprep.subr.mxu0 0.0
    %1720 = vmatpush1.msra.mxu0 0.0
    %1721 = vmatprep.subr.mxu0 0.0
    %1722 = vmatpush1.msra.mxu0 0.0
    %1723 = vmatprep.mubr.f32.mxu0 0.0
    %1724 = vmatmul.mubr.f32.gmra.mrb[0].mxu0 %v1564
    %v1725 = vpop.f32.mrb[0].mxu0
    %v1726 = vadd.f32 0.0, %v1725
    %v1727 = vpop.f32.mrb[0].mxu0
    %1728 = vmatprep.mubr.f32.mxu0 0.0
    %1729 = vmatmul.mubr.f32.gmra.mrb[0].mxu0 %v1567
    %v1730 = vpop.f32.mrb[0].mxu0
    %v1731 = vadd.f32 0.0, %v1730
    %v1732 = vpop.f32.mrb[0].mxu0
    %1733 = vmatprep.mubr.f32.mxu0 0.0
    %1734 = vmatmul.mubr.f32.gmra.mrb[0].mxu0 %v1570
    %v1735 = vpop.f32.mrb[0].mxu0
    %v1736 = vadd.f32 0.0, %v1735
    %v1737 = vpop.f32.mrb[0].mxu0
    %1738 = vmatprep.mubr.f32.mxu0 0.0
    %1739 = vmatmul.mubr.f32.gmra.mrb[0].mxu0 %v1573
    %v1740 = vpop.f32.mrb[0].mxu0
    %v1741 = vadd.f32 0.0, %v1740
    %v1742 = vpop.f32.mrb[0].mxu0
    %1743 = vmatprep.mubr.f32.mxu0 0.0
    %1744 = vmatmul.mubr.f32.gmra.mrb[0].mxu0 %v1576
    %v1745 = vpop.f32.mrb[0].mxu0
    %v1746 = vadd.f32 0.0, %v1745
    %v1747 = vpop.f32.mrb[0].mxu0
    %1748 = vmatprep.mubr.f32.mxu0 0.0
    %1749 = vmatmul.mubr.f32.gmra.mrb[0].mxu0 %v1579
    %v1750 = vpop.f32.mrb[0].mxu0
    %v1751 = vadd.f32 0.0, %v1750
    %v1752 = vpop.f32.mrb[0].mxu0
    %1753 = vmatprep.mubr.f32.mxu0 0.0
    %1754 = vmatmul.mubr.f32.gmra.mrb[0].mxu0 %v1582
    %v1755 = vpop.f32.mrb[0].mxu0
    %v1756 = vadd.f32 0.0, %v1755
    %v1757 = vpop.f32.mrb[0].mxu0
    %1758 = vmatprep.mubr.f32.mxu0 0.0
    %1759 = vmatmul.mubr.f32.gmra.mrb[0].mxu0 %v1585
    %v1760 = vpop.f32.mrb[0].mxu0
    %v1761 = vadd.f32 0.0, %v1760
    %v1762 = vpop.f32.mrb[0].mxu0
    %1763 = vmatprep.mubr.f32.mxu0 0.0
    %1764 = vmatmul.mubr.f32.gmra.mrb[0].mxu0 %v1588
    %v1765 = vpop.f32.mrb[0].mxu0
    %v1766 = vadd.f32 0.0, %v1765
    %v1767 = vpop.f32.mrb[0].mxu0
    %1768 = vmatprep.mubr.f32.mxu0 0.0
    %1769 = vmatmul.mubr.f32.gmra.mrb[0].mxu0 %v1591
    %v1770 = vpop.f32.mrb[0].mxu0
    %v1771 = vadd.f32 0.0, %v1770
    %v1772 = vpop.f32.mrb[0].mxu0
    %1773 = vmatprep.mubr.f32.mxu0 0.0
    %1774 = vmatmul.mubr.f32.gmra.mrb[0].mxu0 %v1594
    %v1775 = vpop.f32.mrb[0].mxu0
    %v1776 = vadd.f32 0.0, %v1775
    %v1777 = vpop.f32.mrb[0].mxu0
    %1778 = vmatprep.mubr.f32.mxu0 0.0
    %1779 = vmatmul.mubr.f32.gmra.mrb[0].mxu0 %v1597
    %v1780 = vpop.f32.mrb[0].mxu0
    %v1781 = vadd.f32 0.0, %v1780
    %v1782 = vpop.f32.mrb[0].mxu0
    %1783 = vmatprep.mubr.f32.mxu0 0.0
    %1784 = vmatmul.mubr.f32.gmra.mrb[0].mxu0 %v1600
    %v1785 = vpop.f32.mrb[0].mxu0
    %v1786 = vadd.f32 0.0, %v1785
    %v1787 = vpop.f32.mrb[0].mxu0
    %1788 = vmatprep.mubr.f32.mxu0 0.0
    %1789 = vmatmul.mubr.f32.gmra.mrb[0].mxu0 %v1603
    %v1790 = vpop.f32.mrb[0].mxu0
    %v1791 = vadd.f32 0.0, %v1790
    %v1792 = vpop.f32.mrb[0].mxu0
    %1793 = vmatprep.mubr.f32.mxu0 0.0
    %1794 = vmatmul.mubr.f32.gmra.mrb[0].mxu0 %v1606
    %v1795 = vpop.f32.mrb[0].mxu0
    %v1796 = vadd.f32 0.0, %v1795
    %v1797 = vpop.f32.mrb[0].mxu0
    %1798 = vmatprep.mubr.f32.mxu0 0.0
    %1799 = vmatmul.mubr.f32.gmra.mrb[0].mxu0 %v1609
    %v1800 = vpop.f32.mrb[0].mxu0
    %v1801 = vadd.f32 0.0, %v1800
    %v1802 = vpop.f32.mrb[0].mxu0
    %1803 = vmatprep.mubr.f32.mxu0 0.0
    %1804 = vmatmul.mubr.f32.gmra.mrb[0].mxu0 %v1612
    %v1805 = vpop.f32.mrb[0].mxu0
    %v1806 = vadd.f32 0.0, %v1805
    %v1807 = vpop.f32.mrb[0].mxu0
    %1808 = vmatprep.mubr.f32.mxu0 0.0
    %1809 = vmatmul.mubr.f32.gmra.mrb[0].mxu0 %v1615
    %v1810 = vpop.f32.mrb[0].mxu0
    %v1811 = vadd.f32 0.0, %v1810
    %v1812 = vpop.f32.mrb[0].mxu0
    %1813 = vmatprep.mubr.f32.mxu0 0.0
    %1814 = vmatmul.mubr.f32.gmra.mrb[0].mxu0 %v1618
    %v1815 = vpop.f32.mrb[0].mxu0
    %v1816 = vadd.f32 0.0, %v1815
    %v1817 = vpop.f32.mrb[0].mxu0
    %1818 = vmatprep.mubr.f32.mxu0 0.0
    %1819 = vmatmul.mubr.f32.gmra.mrb[0].mxu0 %v1621
    %v1820 = vpop.f32.mrb[0].mxu0
    %v1821 = vadd.f32 0.0, %v1820
    %v1822 = vpop.f32.mrb[0].mxu0
    %1823 = vmatprep.mubr.f32.mxu0 0.0
    %1824 = vmatmul.mubr.f32.gmra.mrb[0].mxu0 %v1624
    %v1825 = vpop.f32.mrb[0].mxu0
    %v1826 = vadd.f32 0.0, %v1825
    %v1827 = vpop.f32.mrb[0].mxu0
    %1828 = vmatprep.mubr.f32.mxu0 0.0
    %1829 = vmatmul.mubr.f32.gmra.mrb[0].mxu0 %v1627
    %v1830 = vpop.f32.mrb[0].mxu0
    %v1831 = vadd.f32 0.0, %v1830
    %v1832 = vpop.f32.mrb[0].mxu0
    %1833 = vmatprep.mubr.f32.mxu0 0.0
    %1834 = vmatmul.mubr.f32.gmra.mrb[0].mxu0 %v1630
    %v1835 = vpop.f32.mrb[0].mxu0
    %v1836 = vadd.f32 0.0, %v1835
    %v1837 = vpop.f32.mrb[0].mxu0
    %1838 = vmatprep.mubr.f32.mxu0 0.0
    %1839 = vmatmul.mubr.f32.gmra.mrb[0].mxu0 %v1633
    %v1840 = vpop.f32.mrb[0].mxu0
    %v1841 = vadd.f32 0.0, %v1840
    %v1842 = vpop.f32.mrb[0].mxu0
    %1843 = vmatprep.mubr.f32.mxu0 0.0
    %1844 = vmatmul.mubr.f32.gmra.mrb[0].mxu0 %v1636
    %v1845 = vpop.f32.mrb[0].mxu0
    %v1846 = vadd.f32 0.0, %v1845
    %v1847 = vpop.f32.mrb[0].mxu0
    %1848 = vmatprep.mubr.f32.mxu0 0.0
    %1849 = vmatmul.mubr.f32.gmra.mrb[0].mxu0 %v1639
    %v1850 = vpop.f32.mrb[0].mxu0
    %v1851 = vadd.f32 0.0, %v1850
    %v1852 = vpop.f32.mrb[0].mxu0
    %1853 = vmatprep.mubr.f32.mxu0 0.0
    %1854 = vmatmul.mubr.f32.gmra.mrb[0].mxu0 %v1642
    %v1855 = vpop.f32.mrb[0].mxu0
    %v1856 = vadd.f32 0.0, %v1855
    %v1857 = vpop.f32.mrb[0].mxu0
    %1858 = vmatprep.mubr.f32.mxu0 0.0
    %1859 = vmatmul.mubr.f32.gmra.mrb[0].mxu0 %v1645
    %v1860 = vpop.f32.mrb[0].mxu0
    %v1861 = vadd.f32 0.0, %v1860
    %v1862 = vpop.f32.mrb[0].mxu0
    %1863 = vmatprep.mubr.f32.mxu0 0.0
    %1864 = vmatmul.mubr.f32.gmra.mrb[0].mxu0 %v1648
    %v1865 = vpop.f32.mrb[0].mxu0
    %v1866 = vadd.f32 0.0, %v1865
    %v1867 = vpop.f32.mrb[0].mxu0
    %1868 = vmatprep.mubr.f32.mxu0 0.0
    %1869 = vmatmul.mubr.f32.gmra.mrb[0].mxu0 %v1651
    %v1870 = vpop.f32.mrb[0].mxu0
    %v1871 = vadd.f32 0.0, %v1870
    %v1872 = vpop.f32.mrb[0].mxu0
    %1873 = vmatprep.mubr.f32.mxu0 0.0
    %1874 = vmatmul.mubr.f32.gmra.mrb[0].mxu0 %v1654
    %v1875 = vpop.f32.mrb[0].mxu0
    %v1876 = vadd.f32 0.0, %v1875
    %v1877 = vpop.f32.mrb[0].mxu0
    %1878 = vmatprep.mubr.f32.mxu0 0.0
    %1879 = vmatmul.mubr.f32.gmra.mrb[0].mxu0 %v1657
    %v1880 = vpop.f32.mrb[0].mxu0
    %v1881 = vadd.f32 0.0, %v1880
    %v1882 = vpop.f32.mrb[0].mxu0
    %1883 = vdwg.mxu0
    %1884 = vst.msk [vmem:[#allocation3] sm:$0xff] %vm700, 0.0
    %1885 = vst.msk [vmem:[#allocation3 + $0x30] sm:$0xff] %vm700, 0.0
    %1886 = vst.msk [vmem:[#allocation3 + $0x60] sm:$0xff] %vm700, 0.0
    %1887 = vst.msk [vmem:[#allocation3 + $0x90] sm:$0xff] %vm700, 0.0
    %1888 = vst.msk [vmem:[#allocation3 + $0xc0] sm:$0xff] %vm700, 0.0
    %1889 = vst.msk [vmem:[#allocation3 + $0xf0] sm:$0xff] %vm700, 0.0
    %1890 = vst.msk [vmem:[#allocation3 + $0x120] sm:$0xff] %vm700, 0.0
    %1891 = vst.msk [vmem:[#allocation3 + $0x150] sm:$0xff] %vm700, 0.0
    %1892 = vst.msk [vmem:[#allocation3 + $0x28] sm:$0xff] %vm700, 0.0
    %1893 = vst.msk [vmem:[#allocation3 + $0x58] sm:$0xff] %vm700, 0.0
    %1894 = vst.msk [vmem:[#allocation3 + $0x88] sm:$0xff] %vm700, 0.0
    %1895 = vst.msk [vmem:[#allocation3 + $0xb8] sm:$0xff] %vm700, 0.0
    %1896 = vst.msk [vmem:[#allocation3 + $0xe8] sm:$0xff] %vm700, 0.0
    %1897 = vst.msk [vmem:[#allocation3 + $0x118] sm:$0xff] %vm700, 0.0
    %1898 = vst.msk [vmem:[#allocation3 + $0x148] sm:$0xff] %vm700, 0.0
    %1899 = vst.msk [vmem:[#allocation3 + $0x178] sm:$0xff] %vm700, 0.0
    %1900 = vst.msk [vmem:[#allocation3 + $0x8] sm:$0xff] %vm700, %v1726
    %1901 = vst.msk [vmem:[#allocation3 + $0x10] sm:$0xff] %vm700, %v1731
    %1902 = vst.msk [vmem:[#allocation3 + $0x18] sm:$0xff] %vm700, %v1736
    %1903 = vst.msk [vmem:[#allocation3 + $0x20] sm:$0xff] %vm700, %v1741
    %1904 = vst.msk [vmem:[#allocation3 + $0x38] sm:$0xff] %vm700, %v1746
    %1905 = vst.msk [vmem:[#allocation3 + $0x40] sm:$0xff] %vm700, %v1751
    %1906 = vst.msk [vmem:[#allocation3 + $0x48] sm:$0xff] %vm700, %v1756
    %1907 = vst.msk [vmem:[#allocation3 + $0x50] sm:$0xff] %vm700, %v1761
    %1908 = vst.msk [vmem:[#allocation3 + $0x68] sm:$0xff] %vm700, %v1766
    %1909 = vst.msk [vmem:[#allocation3 + $0x70] sm:$0xff] %vm700, %v1771
    %1910 = vst.msk [vmem:[#allocation3 + $0x78] sm:$0xff] %vm700, %v1776
    %1911 = vst.msk [vmem:[#allocation3 + $0x80] sm:$0xff] %vm700, %v1781
    %1912 = vst.msk [vmem:[#allocation3 + $0x98] sm:$0xff] %vm700, %v1786
    %1913 = vst.msk [vmem:[#allocation3 + $0xa0] sm:$0xff] %vm700, %v1791
    %1914 = vst.msk [vmem:[#allocation3 + $0xa8] sm:$0xff] %vm700, %v1796
    %1915 = vst.msk [vmem:[#allocation3 + $0xb0] sm:$0xff] %vm700, %v1801
    %1916 = vst.msk [vmem:[#allocation3 + $0xc8] sm:$0xff] %vm700, %v1806
    %1917 = vst.msk [vmem:[#allocation3 + $0xd0] sm:$0xff] %vm700, %v1811
    %1918 = vst.msk [vmem:[#allocation3 + $0xd8] sm:$0xff] %vm700, %v1816
    %1919 = vst.msk [vmem:[#allocation3 + $0xe0] sm:$0xff] %vm700, %v1821
    %1920 = vst.msk [vmem:[#allocation3 + $0xf8] sm:$0xff] %vm700, %v1826
    %1921 = vst.msk [vmem:[#allocation3 + $0x100] sm:$0xff] %vm700, %v1831
    %1922 = vst.msk [vmem:[#allocation3 + $0x108] sm:$0xff] %vm700, %v1836
    %1923 = vst.msk [vmem:[#allocation3 + $0x110] sm:$0xff] %vm700, %v1841
    %1924 = vst.msk [vmem:[#allocation3 + $0x128] sm:$0xff] %vm700, %v1846
    %1925 = vst.msk [vmem:[#allocation3 + $0x130] sm:$0xff] %vm700, %v1851
    %1926 = vst.msk [vmem:[#allocation3 + $0x138] sm:$0xff] %vm700, %v1856
    %1927 = vst.msk [vmem:[#allocation3 + $0x140] sm:$0xff] %vm700, %v1861
    %1928 = vst.msk [vmem:[#allocation3 + $0x158] sm:$0xff] %vm700, %v1866
    %1929 = vst.msk [vmem:[#allocation3 + $0x160] sm:$0xff] %vm700, %v1871
    %1930 = vst.msk [vmem:[#allocation3 + $0x168] sm:$0xff] %vm700, %v1876
    %1931 = vst.msk [vmem:[#allocation3 + $0x170] sm:$0xff] %vm700, %v1881
    %vm1932 = vcmp.eq.s32.totalorder %v1135, 0
    %v1933 = vld [vmem:[#allocation3 + $0x7] sm:$0xff]
    %v1934 = vld [vmem:[#allocation3 + $0xf] sm:$0xff]
    %v1935 = vld [vmem:[#allocation3 + $0x17] sm:$0xff]
    %v1936 = vld [vmem:[#allocation3 + $0x1f] sm:$0xff]
    %v1937 = vld [vmem:[#allocation3 + $0x37] sm:$0xff]
    %v1938 = vld [vmem:[#allocation3 + $0x3f] sm:$0xff]
    %v1939 = vld [vmem:[#allocation3 + $0x47] sm:$0xff]
    %v1940 = vld [vmem:[#allocation3 + $0x4f] sm:$0xff]
    %v1941 = vld [vmem:[#allocation3 + $0x67] sm:$0xff]
    %v1942 = vld [vmem:[#allocation3 + $0x6f] sm:$0xff]
    %v1943 = vld [vmem:[#allocation3 + $0x77] sm:$0xff]
    %v1944 = vld [vmem:[#allocation3 + $0x7f] sm:$0xff]
    %v1945 = vld [vmem:[#allocation3 + $0x97] sm:$0xff]
    %v1946 = vld [vmem:[#allocation3 + $0x9f] sm:$0xff]
    %v1947 = vld [vmem:[#allocation3 + $0xa7] sm:$0xff]
    %v1948 = vld [vmem:[#allocation3 + $0xaf] sm:$0xff]
    %v1949 = vld [vmem:[#allocation3 + $0xc7] sm:$0xff]
    %v1950 = vld [vmem:[#allocation3 + $0xcf] sm:$0xff]
    %v1951 = vld [vmem:[#allocation3 + $0xd7] sm:$0xff]
    %v1952 = vld [vmem:[#allocation3 + $0xdf] sm:$0xff]
    %v1953 = vld [vmem:[#allocation3 + $0xf7] sm:$0xff]
    %v1954 = vld [vmem:[#allocation3 + $0xff] sm:$0xff]
    %v1955 = vld [vmem:[#allocation3 + $0x107] sm:$0xff]
    %v1956 = vld [vmem:[#allocation3 + $0x10f] sm:$0xff]
    %v1957 = vld [vmem:[#allocation3 + $0x127] sm:$0xff]
    %v1958 = vld [vmem:[#allocation3 + $0x12f] sm:$0xff]
    %v1959 = vld [vmem:[#allocation3 + $0x137] sm:$0xff]
    %v1960 = vld [vmem:[#allocation3 + $0x13f] sm:$0xff]
    %v1961 = vld [vmem:[#allocation3 + $0x157] sm:$0xff]
    %v1962 = vld [vmem:[#allocation3 + $0x15f] sm:$0xff]
    %v1963 = vld [vmem:[#allocation3 + $0x167] sm:$0xff]
    %v1964 = vld [vmem:[#allocation3 + $0x16f] sm:$0xff]
    %v1965 = vsel %vm1932, %v1933, 0.0
    %v1966 = vsel %vm1932, %v1934, 0.0
    %v1967 = vsel %vm1932, %v1935, 0.0
    %v1968 = vsel %vm1932, %v1936, 0.0
    %v1969 = vsel %vm1932, %v1937, 0.0
    %v1970 = vsel %vm1932, %v1938, 0.0
    %v1971 = vsel %vm1932, %v1939, 0.0
    %v1972 = vsel %vm1932, %v1940, 0.0
    %v1973 = vsel %vm1932, %v1941, 0.0
    %v1974 = vsel %vm1932, %v1942, 0.0
    %v1975 = vsel %vm1932, %v1943, 0.0
    %v1976 = vsel %vm1932, %v1944, 0.0
    %v1977 = vsel %vm1932, %v1945, 0.0
    %v1978 = vsel %vm1932, %v1946, 0.0
    %v1979 = vsel %vm1932, %v1947, 0.0
    %v1980 = vsel %vm1932, %v1948, 0.0
    %v1981 = vsel %vm1932, %v1949, 0.0
    %v1982 = vsel %vm1932, %v1950, 0.0
    %v1983 = vsel %vm1932, %v1951, 0.0
    %v1984 = vsel %vm1932, %v1952, 0.0
    %v1985 = vsel %vm1932, %v1953, 0.0
    %v1986 = vsel %vm1932, %v1954, 0.0
    %v1987 = vsel %vm1932, %v1955, 0.0
    %v1988 = vsel %vm1932, %v1956, 0.0
    %v1989 = vsel %vm1932, %v1957, 0.0
    %v1990 = vsel %vm1932, %v1958, 0.0
    %v1991 = vsel %vm1932, %v1959, 0.0
    %v1992 = vsel %vm1932, %v1960, 0.0
    %v1993 = vsel %vm1932, %v1961, 0.0
    %v1994 = vsel %vm1932, %v1962, 0.0
    %v1995 = vsel %vm1932, %v1963, 0.0
    %v1996 = vsel %vm1932, %v1964, 0.0
    %vm1997 = vcmp.eq.s32.totalorder %v1135, 1
    %v1998 = vsel %vm1997, %v1726, 0.0
    %v1999 = vsel %vm1997, %v1731, 0.0
    %v2000 = vsel %vm1997, %v1736, 0.0
    %v2001 = vsel %vm1997, %v1741, 0.0
    %v2002 = vsel %vm1997, %v1746, 0.0
    %v2003 = vsel %vm1997, %v1751, 0.0
    %v2004 = vsel %vm1997, %v1756, 0.0
    %v2005 = vsel %vm1997, %v1761, 0.0
    %v2006 = vsel %vm1997, %v1766, 0.0
    %v2007 = vsel %vm1997, %v1771, 0.0
    %v2008 = vsel %vm1997, %v1776, 0.0
    %v2009 = vsel %vm1997, %v1781, 0.0
    %v2010 = vsel %vm1997, %v1786, 0.0
    %v2011 = vsel %vm1997, %v1791, 0.0
    %v2012 = vsel %vm1997, %v1796, 0.0
    %v2013 = vsel %vm1997, %v1801, 0.0
    %v2014 = vsel %vm1997, %v1806, 0.0
    %v2015 = vsel %vm1997, %v1811, 0.0
    %v2016 = vsel %vm1997, %v1816, 0.0
    %v2017 = vsel %vm1997, %v1821, 0.0
    %v2018 = vsel %vm1997, %v1826, 0.0
    %v2019 = vsel %vm1997, %v1831, 0.0
    %v2020 = vsel %vm1997, %v1836, 0.0
    %v2021 = vsel %vm1997, %v1841, 0.0
    %v2022 = vsel %vm1997, %v1846, 0.0
    %v2023 = vsel %vm1997, %v1851, 0.0
    %v2024 = vsel %vm1997, %v1856, 0.0
    %v2025 = vsel %vm1997, %v1861, 0.0
    %v2026 = vsel %vm1997, %v1866, 0.0
    %v2027 = vsel %vm1997, %v1871, 0.0
    %v2028 = vsel %vm1997, %v1876, 0.0
    %v2029 = vsel %vm1997, %v1881, 0.0
    %v2030 = vadd.f32 %v1965, %v1998
    %v2031 = vadd.f32 %v1966, %v1999
    %v2032 = vadd.f32 %v1967, %v2000
    %v2033 = vadd.f32 %v1968, %v2001
    %v2034 = vadd.f32 %v1969, %v2002
    %v2035 = vadd.f32 %v1970, %v2003
    %v2036 = vadd.f32 %v1971, %v2004
    %v2037 = vadd.f32 %v1972, %v2005
    %v2038 = vadd.f32 %v1973, %v2006
    %v2039 = vadd.f32 %v1974, %v2007
    %v2040 = vadd.f32 %v1975, %v2008
    %v2041 = vadd.f32 %v1976, %v2009
    %v2042 = vadd.f32 %v1977, %v2010
    %v2043 = vadd.f32 %v1978, %v2011
    %v2044 = vadd.f32 %v1979, %v2012
    %v2045 = vadd.f32 %v1980, %v2013
    %v2046 = vadd.f32 %v1981, %v2014
    %v2047 = vadd.f32 %v1982, %v2015
    %v2048 = vadd.f32 %v1983, %v2016
    %v2049 = vadd.f32 %v1984, %v2017
    %v2050 = vadd.f32 %v1985, %v2018
    %v2051 = vadd.f32 %v1986, %v2019
    %v2052 = vadd.f32 %v1987, %v2020
    %v2053 = vadd.f32 %v1988, %v2021
    %v2054 = vadd.f32 %v1989, %v2022
    %v2055 = vadd.f32 %v1990, %v2023
    %v2056 = vadd.f32 %v1991, %v2024
    %v2057 = vadd.f32 %v1992, %v2025
    %v2058 = vadd.f32 %v1993, %v2026
    %v2059 = vadd.f32 %v1994, %v2027
    %v2060 = vadd.f32 %v1995, %v2028
    %v2061 = vadd.f32 %v1996, %v2029
    %vm2062 = vcmp.eq.s32.totalorder %v1135, 2
    %v2063 = vld [vmem:[#allocation3 + $0x9] sm:$0xff]
    %v2064 = vld [vmem:[#allocation3 + $0x11] sm:$0xff]
    %v2065 = vld [vmem:[#allocation3 + $0x19] sm:$0xff]
    %v2066 = vld [vmem:[#allocation3 + $0x21] sm:$0xff]
    %v2067 = vld [vmem:[#allocation3 + $0x39] sm:$0xff]
    %v2068 = vld [vmem:[#allocation3 + $0x41] sm:$0xff]
    %v2069 = vld [vmem:[#allocation3 + $0x49] sm:$0xff]
    %v2070 = vld [vmem:[#allocation3 + $0x51] sm:$0xff]
    %v2071 = vld [vmem:[#allocation3 + $0x69] sm:$0xff]
    %v2072 = vld [vmem:[#allocation3 + $0x71] sm:$0xff]
    %v2073 = vld [vmem:[#allocation3 + $0x79] sm:$0xff]
    %v2074 = vld [vmem:[#allocation3 + $0x81] sm:$0xff]
    %v2075 = vld [vmem:[#allocation3 + $0x99] sm:$0xff]
    %v2076 = vld [vmem:[#allocation3 + $0xa1] sm:$0xff]
    %v2077 = vld [vmem:[#allocation3 + $0xa9] sm:$0xff]
    %v2078 = vld [vmem:[#allocation3 + $0xb1] sm:$0xff]
    %v2079 = vld [vmem:[#allocation3 + $0xc9] sm:$0xff]
    %v2080 = vld [vmem:[#allocation3 + $0xd1] sm:$0xff]
    %v2081 = vld [vmem:[#allocation3 + $0xd9] sm:$0xff]
    %v2082 = vld [vmem:[#allocation3 + $0xe1] sm:$0xff]
    %v2083 = vld [vmem:[#allocation3 + $0xf9] sm:$0xff]
    %v2084 = vld [vmem:[#allocation3 + $0x101] sm:$0xff]
    %v2085 = vld [vmem:[#allocation3 + $0x109] sm:$0xff]
    %v2086 = vld [vmem:[#allocation3 + $0x111] sm:$0xff]
    %v2087 = vld [vmem:[#allocation3 + $0x129] sm:$0xff]
    %v2088 = vld [vmem:[#allocation3 + $0x131] sm:$0xff]
    %v2089 = vld [vmem:[#allocation3 + $0x139] sm:$0xff]
    %v2090 = vld [vmem:[#allocation3 + $0x141] sm:$0xff]
    %v2091 = vld [vmem:[#allocation3 + $0x159] sm:$0xff]
    %v2092 = vld [vmem:[#allocation3 + $0x161] sm:$0xff]
    %v2093 = vld [vmem:[#allocation3 + $0x169] sm:$0xff]
    %v2094 = vld [vmem:[#allocation3 + $0x171] sm:$0xff]
    %v2095 = vsel %vm2062, %v2063, 0.0
    %v2096 = vsel %vm2062, %v2064, 0.0
    %v2097 = vsel %vm2062, %v2065, 0.0
    %v2098 = vsel %vm2062, %v2066, 0.0
    %v2099 = vsel %vm2062, %v2067, 0.0
    %v2100 = vsel %vm2062, %v2068, 0.0
    %v2101 = vsel %vm2062, %v2069, 0.0
    %v2102 = vsel %vm2062, %v2070, 0.0
    %v2103 = vsel %vm2062, %v2071, 0.0
    %v2104 = vsel %vm2062, %v2072, 0.0
    %v2105 = vsel %vm2062, %v2073, 0.0
    %v2106 = vsel %vm2062, %v2074, 0.0
    %v2107 = vsel %vm2062, %v2075, 0.0
    %v2108 = vsel %vm2062, %v2076, 0.0
    %v2109 = vsel %vm2062, %v2077, 0.0
    %v2110 = vsel %vm2062, %v2078, 0.0
    %v2111 = vsel %vm2062, %v2079, 0.0
    %v2112 = vsel %vm2062, %v2080, 0.0
    %v2113 = vsel %vm2062, %v2081, 0.0
    %v2114 = vsel %vm2062, %v2082, 0.0
    %v2115 = vsel %vm2062, %v2083, 0.0
    %v2116 = vsel %vm2062, %v2084, 0.0
    %v2117 = vsel %vm2062, %v2085, 0.0
    %v2118 = vsel %vm2062, %v2086, 0.0
    %v2119 = vsel %vm2062, %v2087, 0.0
    %v2120 = vsel %vm2062, %v2088, 0.0
    %v2121 = vsel %vm2062, %v2089, 0.0
    %v2122 = vsel %vm2062, %v2090, 0.0
    %v2123 = vsel %vm2062, %v2091, 0.0
    %v2124 = vsel %vm2062, %v2092, 0.0
    %v2125 = vsel %vm2062, %v2093, 0.0
    %v2126 = vsel %vm2062, %v2094, 0.0
    %v2127 = vadd.f32 %v2030, %v2095
    %v2128 = vadd.f32 %v2031, %v2096
    %v2129 = vadd.f32 %v2032, %v2097
    %v2130 = vadd.f32 %v2033, %v2098
    %v2131 = vadd.f32 %v2034, %v2099
    %v2132 = vadd.f32 %v2035, %v2100
    %v2133 = vadd.f32 %v2036, %v2101
    %v2134 = vadd.f32 %v2037, %v2102
    %v2135 = vadd.f32 %v2038, %v2103
    %v2136 = vadd.f32 %v2039, %v2104
    %v2137 = vadd.f32 %v2040, %v2105
    %v2138 = vadd.f32 %v2041, %v2106
    %v2139 = vadd.f32 %v2042, %v2107
    %v2140 = vadd.f32 %v2043, %v2108
    %v2141 = vadd.f32 %v2044, %v2109
    %v2142 = vadd.f32 %v2045, %v2110
    %v2143 = vadd.f32 %v2046, %v2111
    %v2144 = vadd.f32 %v2047, %v2112
    %v2145 = vadd.f32 %v2048, %v2113
    %v2146 = vadd.f32 %v2049, %v2114
    %v2147 = vadd.f32 %v2050, %v2115
    %v2148 = vadd.f32 %v2051, %v2116
    %v2149 = vadd.f32 %v2052, %v2117
    %v2150 = vadd.f32 %v2053, %v2118
    %v2151 = vadd.f32 %v2054, %v2119
    %v2152 = vadd.f32 %v2055, %v2120
    %v2153 = vadd.f32 %v2056, %v2121
    %v2154 = vadd.f32 %v2057, %v2122
    %v2155 = vadd.f32 %v2058, %v2123
    %v2156 = vadd.f32 %v2059, %v2124
    %v2157 = vadd.f32 %v2060, %v2125
    %v2158 = vadd.f32 %v2061, %v2126
    %v2159 = vsel %vm700, %v2127, 0.0
    %2160 = vadd.xlane.f32.xlu0 %v2159
    %v2161 = vpop.xlane.xlu0 %2160
    %v2162 = vsel %vm700, %v2128, 0.0
    %2163 = vadd.xlane.f32.xlu0 %v2162
    %v2164 = vpop.xlane.xlu0 %2163
    %v2165 = vsel %vm700, %v2129, 0.0
    %2166 = vadd.xlane.f32.xlu0 %v2165
    %v2167 = vpop.xlane.xlu0 %2166
    %v2168 = vsel %vm700, %v2130, 0.0
    %2169 = vadd.xlane.f32.xlu0 %v2168
    %v2170 = vpop.xlane.xlu0 %2169
    %v2171 = vsel %vm700, %v2131, 0.0
    %2172 = vadd.xlane.f32.xlu0 %v2171
    %v2173 = vpop.xlane.xlu0 %2172
    %v2174 = vsel %vm700, %v2132, 0.0
    %2175 = vadd.xlane.f32.xlu0 %v2174
    %v2176 = vpop.xlane.xlu0 %2175
    %v2177 = vsel %vm700, %v2133, 0.0
    %2178 = vadd.xlane.f32.xlu0 %v2177
    %v2179 = vpop.xlane.xlu0 %2178
    %v2180 = vsel %vm700, %v2134, 0.0
    %2181 = vadd.xlane.f32.xlu0 %v2180
    %v2182 = vpop.xlane.xlu0 %2181
    %v2183 = vsel %vm700, %v2135, 0.0
    %2184 = vadd.xlane.f32.xlu0 %v2183
    %v2185 = vpop.xlane.xlu0 %2184
    %v2186 = vsel %vm700, %v2136, 0.0
    %2187 = vadd.xlane.f32.xlu0 %v2186
    %v2188 = vpop.xlane.xlu0 %2187
    %v2189 = vsel %vm700, %v2137, 0.0
    %2190 = vadd.xlane.f32.xlu0 %v2189
    %v2191 = vpop.xlane.xlu0 %2190
    %v2192 = vsel %vm700, %v2138, 0.0
    %2193 = vadd.xlane.f32.xlu0 %v2192
    %v2194 = vpop.xlane.xlu0 %2193
    %v2195 = vsel %vm700, %v2139, 0.0
    %2196 = vadd.xlane.f32.xlu0 %v2195
    %v2197 = vpop.xlane.xlu0 %2196
    %v2198 = vsel %vm700, %v2140, 0.0
    %2199 = vadd.xlane.f32.xlu0 %v2198
    %v2200 = vpop.xlane.xlu0 %2199
    %v2201 = vsel %vm700, %v2141, 0.0
    %2202 = vadd.xlane.f32.xlu0 %v2201
    %v2203 = vpop.xlane.xlu0 %2202
    %v2204 = vsel %vm700, %v2142, 0.0
    %2205 = vadd.xlane.f32.xlu0 %v2204
    %v2206 = vpop.xlane.xlu0 %2205
    %v2207 = vsel %vm700, %v2143, 0.0
    %2208 = vadd.xlane.f32.xlu0 %v2207
    %v2209 = vpop.xlane.xlu0 %2208
    %v2210 = vsel %vm700, %v2144, 0.0
    %2211 = vadd.xlane.f32.xlu0 %v2210
    %v2212 = vpop.xlane.xlu0 %2211
    %v2213 = vsel %vm700, %v2145, 0.0
    %2214 = vadd.xlane.f32.xlu0 %v2213
    %v2215 = vpop.xlane.xlu0 %2214
    %v2216 = vsel %vm700, %v2146, 0.0
    %2217 = vadd.xlane.f32.xlu0 %v2216
    %v2218 = vpop.xlane.xlu0 %2217
    %v2219 = vsel %vm700, %v2147, 0.0
    %2220 = vadd.xlane.f32.xlu0 %v2219
    %v2221 = vpop.xlane.xlu0 %2220
    %v2222 = vsel %vm700, %v2148, 0.0
    %2223 = vadd.xlane.f32.xlu0 %v2222
    %v2224 = vpop.xlane.xlu0 %2223
    %v2225 = vsel %vm700, %v2149, 0.0
    %2226 = vadd.xlane.f32.xlu0 %v2225
    %v2227 = vpop.xlane.xlu0 %2226
    %v2228 = vsel %vm700, %v2150, 0.0
    %2229 = vadd.xlane.f32.xlu0 %v2228
    %v2230 = vpop.xlane.xlu0 %2229
    %v2231 = vsel %vm700, %v2151, 0.0
    %2232 = vadd.xlane.f32.xlu0 %v2231
    %v2233 = vpop.xlane.xlu0 %2232
    %v2234 = vsel %vm700, %v2152, 0.0
    %2235 = vadd.xlane.f32.xlu0 %v2234
    %v2236 = vpop.xlane.xlu0 %2235
    %v2237 = vsel %vm700, %v2153, 0.0
    %2238 = vadd.xlane.f32.xlu0 %v2237
    %v2239 = vpop.xlane.xlu0 %2238
    %v2240 = vsel %vm700, %v2154, 0.0
    %2241 = vadd.xlane.f32.xlu0 %v2240
    %v2242 = vpop.xlane.xlu0 %2241
    %v2243 = vsel %vm700, %v2155, 0.0
    %2244 = vadd.xlane.f32.xlu0 %v2243
    %v2245 = vpop.xlane.xlu0 %2244
    %v2246 = vsel %vm700, %v2156, 0.0
    %2247 = vadd.xlane.f32.xlu0 %v2246
    %v2248 = vpop.xlane.xlu0 %2247
    %v2249 = vsel %vm700, %v2157, 0.0
    %2250 = vadd.xlane.f32.xlu0 %v2249
    %v2251 = vpop.xlane.xlu0 %2250
    %v2252 = vsel %vm700, %v2158, 0.0
    %2253 = vadd.xlane.f32.xlu0 %v2252
    %v2254 = vpop.xlane.xlu0 %2253
    %v2255 = vld [vmem:[#allocation4] sm:$0x1]
    %v2257 = vlaneseq
    %v2258 = vshrl.u32 %v2257, 7
    %v2259 = vsub.s32 0, %v2258
    %v2260 = vrot.slane %v2255, %v2259
    %2261 = vset.pattern.permute.xlu0 0
    %2262 = vperm.xlu0 %2261, %v2260
    %v2263 = vpop.permute.xlu0 %2262
    %v2265 = vadd.f32 %v2161, %v2263
    %v2266 = vadd.f32 %v2164, %v2263
    %v2267 = vadd.f32 %v2167, %v2263
    %v2268 = vadd.f32 %v2170, %v2263
    %v2269 = vadd.f32 %v2173, %v2263
    %v2270 = vadd.f32 %v2176, %v2263
    %v2271 = vadd.f32 %v2179, %v2263
    %v2272 = vadd.f32 %v2182, %v2263
    %v2273 = vadd.f32 %v2185, %v2263
    %v2274 = vadd.f32 %v2188, %v2263
    %v2275 = vadd.f32 %v2191, %v2263
    %v2276 = vadd.f32 %v2194, %v2263
    %v2277 = vadd.f32 %v2197, %v2263
    %v2278 = vadd.f32 %v2200, %v2263
    %v2279 = vadd.f32 %v2203, %v2263
    %v2280 = vadd.f32 %v2206, %v2263
    %v2281 = vadd.f32 %v2209, %v2263
    %v2282 = vadd.f32 %v2212, %v2263
    %v2283 = vadd.f32 %v2215, %v2263
    %v2284 = vadd.f32 %v2218, %v2263
    %v2285 = vadd.f32 %v2221, %v2263
    %v2286 = vadd.f32 %v2224, %v2263
    %v2287 = vadd.f32 %v2227, %v2263
    %v2288 = vadd.f32 %v2230, %v2263
    %v2289 = vadd.f32 %v2233, %v2263
    %v2290 = vadd.f32 %v2236, %v2263
    %v2291 = vadd.f32 %v2239, %v2263
    %v2292 = vadd.f32 %v2242, %v2263
    %v2293 = vadd.f32 %v2245, %v2263
    %v2294 = vadd.f32 %v2248, %v2263
    %v2295 = vadd.f32 %v2251, %v2263
    %v2296 = vadd.f32 %v2254, %v2263
    %v2329 = vlaneseq
    %v2330 = vshrl.u32 %v2329, 7
    %v2331 = vsub.s32 %v1135, %v2330
    %v2332 = vrot.slane %v2265, %v2331
    %v2333 = vadd.s32 %v1135, 4294967288
    %v2334 = vlaneseq
    %v2335 = vshrl.u32 %v2334, 7
    %v2336 = vsub.s32 %v2333, %v2335
    %v2337 = vrot.slane %v2266, %v2336
    %vm2338 = vcmask 130112
    %v2339 = vsel %vm2338, %v2337, %v2332
    %v2340 = vadd.s32 %v1135, 4294967280
    %v2341 = vlaneseq
    %v2342 = vshrl.u32 %v2341, 7
    %v2343 = vsub.s32 %v2340, %v2342
    %v2344 = vrot.slane %v2267, %v2343
    %vm2345 = vcmask 195712
    %v2346 = vsel %vm2345, %v2344, %v2339
    %v2347 = vadd.s32 %v1135, 4294967272
    %v2348 = vlaneseq
    %v2349 = vshrl.u32 %v2348, 7
    %v2350 = vsub.s32 %v2347, %v2349
    %v2351 = vrot.slane %v2268, %v2350
    %vm2352 = vcmask 261312
    %v2353 = vsel %vm2352, %v2351, %v2346
    %v2354 = vlaneseq
    %v2355 = vshrl.u32 %v2354, 7
    %v2356 = vsub.s32 %v1135, %v2355
    %v2357 = vrot.slane %v2269, %v2356
    %v2358 = vlaneseq
    %v2359 = vshrl.u32 %v2358, 7
    %v2360 = vsub.s32 %v2333, %v2359
    %v2361 = vrot.slane %v2270, %v2360
    %v2362 = vsel %vm2338, %v2361, %v2357
    %v2363 = vlaneseq
    %v2364 = vshrl.u32 %v2363, 7
    %v2365 = vsub.s32 %v2340, %v2364
    %v2366 = vrot.slane %v2271, %v2365
    %v2367 = vsel %vm2345, %v2366, %v2362
    %v2368 = vlaneseq
    %v2369 = vshrl.u32 %v2368, 7
    %v2370 = vsub.s32 %v2347, %v2369
    %v2371 = vrot.slane %v2272, %v2370
    %v2372 = vsel %vm2352, %v2371, %v2367
    %v2373 = vlaneseq
    %v2374 = vshrl.u32 %v2373, 7
    %v2375 = vsub.s32 %v1135, %v2374
    %v2376 = vrot.slane %v2273, %v2375
    %v2377 = vlaneseq
    %v2378 = vshrl.u32 %v2377, 7
    %v2379 = vsub.s32 %v2333, %v2378
    %v2380 = vrot.slane %v2274, %v2379
    %v2381 = vsel %vm2338, %v2380, %v2376
    %v2382 = vlaneseq
    %v2383 = vshrl.u32 %v2382, 7
    %v2384 = vsub.s32 %v2340, %v2383
    %v2385 = vrot.slane %v2275, %v2384
    %v2386 = vsel %vm2345, %v2385, %v2381
    %v2387 = vlaneseq
    %v2388 = vshrl.u32 %v2387, 7
    %v2389 = vsub.s32 %v2347, %v2388
    %v2390 = vrot.slane %v2276, %v2389
    %v2391 = vsel %vm2352, %v2390, %v2386
    %v2392 = vlaneseq
    %v2393 = vshrl.u32 %v2392, 7
    %v2394 = vsub.s32 %v1135, %v2393
    %v2395 = vrot.slane %v2277, %v2394
    %v2396 = vlaneseq
    %v2397 = vshrl.u32 %v2396, 7
    %v2398 = vsub.s32 %v2333, %v2397
    %v2399 = vrot.slane %v2278, %v2398
    %v2400 = vsel %vm2338, %v2399, %v2395
    %v2401 = vlaneseq
    %v2402 = vshrl.u32 %v2401, 7
    %v2403 = vsub.s32 %v2340, %v2402
    %v2404 = vrot.slane %v2279, %v2403
    %v2405 = vsel %vm2345, %v2404, %v2400
    %v2406 = vlaneseq
    %v2407 = vshrl.u32 %v2406, 7
    %v2408 = vsub.s32 %v2347, %v2407
    %v2409 = vrot.slane %v2280, %v2408
    %v2410 = vsel %vm2352, %v2409, %v2405
    %v2411 = vlaneseq
    %v2412 = vshrl.u32 %v2411, 7
    %v2413 = vsub.s32 %v1135, %v2412
    %v2414 = vrot.slane %v2281, %v2413
    %v2415 = vlaneseq
    %v2416 = vshrl.u32 %v2415, 7
    %v2417 = vsub.s32 %v2333, %v2416
    %v2418 = vrot.slane %v2282, %v2417
    %v2419 = vsel %vm2338, %v2418, %v2414
    %v2420 = vlaneseq
    %v2421 = vshrl.u32 %v2420, 7
    %v2422 = vsub.s32 %v2340, %v2421
    %v2423 = vrot.slane %v2283, %v2422
    %v2424 = vsel %vm2345, %v2423, %v2419
    %v2425 = vlaneseq
    %v2426 = vshrl.u32 %v2425, 7
    %v2427 = vsub.s32 %v2347, %v2426
    %v2428 = vrot.slane %v2284, %v2427
    %v2429 = vsel %vm2352, %v2428, %v2424
    %v2430 = vlaneseq
    %v2431 = vshrl.u32 %v2430, 7
    %v2432 = vsub.s32 %v1135, %v2431
    %v2433 = vrot.slane %v2285, %v2432
    %v2434 = vlaneseq
    %v2435 = vshrl.u32 %v2434, 7
    %v2436 = vsub.s32 %v2333, %v2435
    %v2437 = vrot.slane %v2286, %v2436
    %v2438 = vsel %vm2338, %v2437, %v2433
    %v2439 = vlaneseq
    %v2440 = vshrl.u32 %v2439, 7
    %v2441 = vsub.s32 %v2340, %v2440
    %v2442 = vrot.slane %v2287, %v2441
    %v2443 = vsel %vm2345, %v2442, %v2438
    %v2444 = vlaneseq
    %v2445 = vshrl.u32 %v2444, 7
    %v2446 = vsub.s32 %v2347, %v2445
    %v2447 = vrot.slane %v2288, %v2446
    %v2448 = vsel %vm2352, %v2447, %v2443
    %v2449 = vlaneseq
    %v2450 = vshrl.u32 %v2449, 7
    %v2451 = vsub.s32 %v1135, %v2450
    %v2452 = vrot.slane %v2289, %v2451
    %v2453 = vlaneseq
    %v2454 = vshrl.u32 %v2453, 7
    %v2455 = vsub.s32 %v2333, %v2454
    %v2456 = vrot.slane %v2290, %v2455
    %v2457 = vsel %vm2338, %v2456, %v2452
    %v2458 = vlaneseq
    %v2459 = vshrl.u32 %v2458, 7
    %v2460 = vsub.s32 %v2340, %v2459
    %v2461 = vrot.slane %v2291, %v2460
    %v2462 = vsel %vm2345, %v2461, %v2457
    %v2463 = vlaneseq
    %v2464 = vshrl.u32 %v2463, 7
    %v2465 = vsub.s32 %v2347, %v2464
    %v2466 = vrot.slane %v2292, %v2465
    %v2467 = vsel %vm2352, %v2466, %v2462
    %v2468 = vlaneseq
    %v2469 = vshrl.u32 %v2468, 7
    %v2470 = vsub.s32 %v1135, %v2469
    %v2471 = vrot.slane %v2293, %v2470
    %v2472 = vlaneseq
    %v2473 = vshrl.u32 %v2472, 7
    %v2474 = vsub.s32 %v2333, %v2473
    %v2475 = vrot.slane %v2294, %v2474
    %v2476 = vsel %vm2338, %v2475, %v2471
    %v2477 = vlaneseq
    %v2478 = vshrl.u32 %v2477, 7
    %v2479 = vsub.s32 %v2340, %v2478
    %v2480 = vrot.slane %v2295, %v2479
    %v2481 = vsel %vm2345, %v2480, %v2476
    %v2482 = vlaneseq
    %v2483 = vshrl.u32 %v2482, 7
    %v2484 = vsub.s32 %v2347, %v2483
    %v2485 = vrot.slane %v2296, %v2484
    %v2486 = vsel %vm2352, %v2485, %v2481
    %vm2487 = vcmask 1041409
    %v2488 = vsel %vm2487, %v2372, %v2353
    %vm2489 = vcmask 1042434
    %v2490 = vsel %vm2489, %v2391, %v2488
    %vm2491 = vcmask 1043459
    %v2492 = vsel %vm2491, %v2410, %v2490
    %vm2493 = vcmask 1044484
    %v2494 = vsel %vm2493, %v2429, %v2492
    %vm2495 = vcmask 1045509
    %v2496 = vsel %vm2495, %v2448, %v2494
    %vm2497 = vcmask 1046534
    %v2498 = vsel %vm2497, %v2467, %v2496
    %vm2499 = vcmask 1047559
    %v2500 = vsel %vm2499, %v2486, %v2498
    %vm2502 = vcmask 261120
    %2503 = vst.msk [vmem:[#allocation16] sm:$0xff] %vm2502, %v2500
    // Predicated region
    $region54: #{tpu_custom_call.1} parent=1 // pred_check
      _
    $region55: #{tpu_custom_call.1} parent=1 // pred_check_branch
      %2505 = sbr.rel (0) target = $region57
    $region56: #{tpu_custom_call.1} parent=1 // pred_region
      %s2507 = ssub.s32 128, 128
      %2508 = vsyncadd [#allocation7], %s2507
      %s2510 = sshll.u32 [#allocation16], 4
      %s2511 = int_to_ptr.vmem [resolvable:$true] %s2510
      %2513 = dma.vmem_to_hbm [thread:$0]  %s2511, 128, %s7, [#allocation7]
    $region57: #{tpu_custom_call.1} parent=1 // pred_fallthru
      _
    // Predicated region
    $region58: #{tpu_custom_call.1} parent=1 // pred_check
      _
    $region59: #{tpu_custom_call.1} parent=1 // pred_check_branch
      %2515 = sbr.rel (0) target = $region61
    $region60: #{tpu_custom_call.1} parent=1 // pred_region
      %2516 = dma.done [#allocation7], 128
    $region61: #{tpu_custom_call.1} parent=1 // pred_fallthru
      _
    %2517 = vsyncpa [#allocation6], 1
    %2518 = vsyncpa [#allocation9], 1
    %2519 = vsyncpa [#allocation12], 1
    %2520 = vsyncpa [#allocation15], 1
    %2521 = vsyncpa [#allocation7], 1

</llo_original>
